<compile_context>
chip_gen: v6e
topology: v6e:2x2x1
jax: 0.10.0
libtpu: 0.0.40
codegen_flags: <defaults>
</compile_context>

<pallas_src>
import numpy as np
from math import pi

import jax
import jax.numpy as jnp
from jax import lax
from jax.experimental import pallas as pl
from jax.experimental.pallas import tpu as pltpu

K = 9      # blur kernel size (9x9)
PAD = 2    # F.conv2d padding=(2, 2)


def gaussian2D_unnormalized(shape=(9, 9), sigma=1.0):
    """MATLAB fspecial-style unnormalized gaussian (same as the PyTorch helper)."""
    m, n = [(ss - 1.0) / 2.0 for ss in shape]
    y, x = np.ogrid[-m:m + 1, -n:n + 1]
    h = np.exp(-(x * x + y * y) / (2.0 * sigma * sigma))
    h[h < np.finfo(h.dtype).eps * h.max()] = 0
    return h.astype(np.float32)


def sample_blur_stds(key, n_emitters, std_min, std_max):
    """Per-emitter blur std draw (deterministic JAX analogue of torch.rand)."""
    return std_min + (std_max - std_min) * jax.random.uniform(
        key, (n_emitters,), dtype=jnp.float32)


def separable_blur_taps(stds):
    """Rank-1 factorization of the BlurLayer weights.

    W_c(y, x) = 1/(2*pi*s_c^2) * gauss_sigma1(y, x) ** (1/s_c^2)
              = [1/(2*pi*s_c^2) * exp(-x^2/(2 s_c^2))] * [exp(-y^2/(2 s_c^2))]
    Exact: the eps-clamp in gaussian2D_unnormalized never fires for sigma=1 on a
    9x9 grid (corner value exp(-16) >> float eps).
    Returns u (C, 9) horizontal taps (norm folded in) and v (C, 9) vertical taps.
    """
    s2 = stds.astype(jnp.float32) ** 2                          # (C,)
    r = jnp.arange(K, dtype=jnp.float32) - (K - 1) / 2.0        # -4..4
    g1 = jnp.exp(-(r[None, :] ** 2) / (2.0 * s2[:, None]))      # (C, 9)
    u = (1.0 / (2.0 * pi * s2))[:, None] * g1                   # (C, 9)
    v = g1                                                      # (C, 9)
    return u.astype(jnp.float32), v.astype(jnp.float32)


def dense_blur_weights(stds):
    """Dense (C, 9, 9) weights built exactly like the PyTorch BlurLayer (for the ref check)."""
    gauss = jnp.asarray(gaussian2D_unnormalized(shape=(K, K), sigma=1.0))
    s2 = stds.astype(jnp.float32) ** 2
    return (1.0 / (2.0 * pi * s2))[:, None, None] * jnp.power(
        gauss[None, :, :], (1.0 / s2)[:, None, None])


def make_blur_kernel(Nb, C, H, W):
    Hp, Wp = H + 2 * PAD, W + 2 * PAD
    Ho, Wo = Hp - K + 1, Wp - K + 1          # = H - 4, W - 4

    def kernel(u_ref, v_ref, x_ref, o_ref, xpad_ref):
        # u_ref, v_ref : SMEM (C*9,) separable taps (scalar reads, hoisted per channel)
        # x_ref        : VMEM (Nb, C, H, W)   unpadded input block
        # o_ref        : VMEM (Nb, 1, Ho, Wo) output block
        # xpad_ref     : VMEM scratch (Nb, C, Hp, Wp) -- zero halo built in-kernel

        # ---- in-kernel zero padding (replaces wrapper-side jnp.pad and its
        # extra HBM pass).  Zero only the 2-wide halo strips, then copy the
        # block into the interior; every element is (re)written each step.
        xpad_ref[:, :, 0:PAD, :] = jnp.zeros((Nb, C, PAD, Wp), jnp.float32)
        xpad_ref[:, :, Hp - PAD:Hp, :] = jnp.zeros((Nb, C, PAD, Wp), jnp.float32)
        xpad_ref[:, :, :, 0:PAD] = jnp.zeros((Nb, C, Hp, PAD), jnp.float32)
        xpad_ref[:, :, :, Wp - PAD:Wp] = jnp.zeros((Nb, C, Hp, PAD), jnp.float32)
        xpad_ref[:, :, PAD:PAD + H, PAD:PAD + W] = x_ref[...].astype(jnp.float32)

        # ---- separable 9+9 tap blur + emitter reduction (18 taps/channel
        # instead of 81).  Each channel plane is loaded once; the shifts are
        # single-axis (lane-only, then sublane-only) shifts of the in-register
        # plane, so there are no per-tap misaligned VMEM reloads.
        acc = jnp.zeros((Nb, Ho, Wo), jnp.float32)
        for c in range(C):
            uc = [u_ref[c * K + k] for k in range(K)]   # hoisted scalar taps
            vc = [v_ref[c * K + k] for k in range(K)]

            plane = xpad_ref[:, c, :, :]                # (Nb, Hp, Wp), one load

            # horizontal pass: 9 lane-shifted MACs
            hx = plane[:, :, 0:Wo] * uc[0]
            for kx in range(1, K):
                hx = hx + plane[:, :, kx:kx + Wo] * uc[kx]

            # vertical pass + sum over emitters: 9 sublane-shifted MACs
            acc = acc + hx[:, 0:Ho, :] * vc[0]
            for ky in range(1, K):
                acc = acc + hx[:, ky:ky + Ho, :] * vc[ky]

        o_ref[:, 0, :, :] = acc.astype(o_ref.dtype)

    return kernel


def _choose_batch_block(N, C, H, W, vmem_budget_bytes=8 * 1024 * 1024):
    """Largest divisor of N keeping the per-step VMEM footprint under budget,
    preferring >= 2 grid steps so both v7x TensorCores get work."""
    Hp, Wp = H + 2 * PAD, W + 2 * PAD
    Ho, Wo = H - 4, W - 4
    per_img = 4 * (2 * C * H * W          # double-buffered input block
                   + C * Hp * Wp          # padded VMEM scratch
                   + 2 * Ho * Wo)         # double-buffered output block
    max_nb = max(1, vmem_budget_bytes // per_img)
    divisors = [d for d in range(1, N + 1) if N % d == 0 and d <= max_nb]
    if not divisors:
        divisors = [1]
    multi_step = [d for d in divisors if N // d >= 2]
    return max(multi_step) if multi_step else max(divisors)


def blur_forward(psfs, u_taps, v_taps):
    """psfs: (N, C, H, W) f32; u/v taps: (C, 9) -> (N, 1, H-4, W-4) == BlurLayer.forward."""
    N, C, H, W = psfs.shape
    Hp, Wp = H + 2 * PAD, W + 2 * PAD
    Ho, Wo = Hp - K + 1, Wp - K + 1

    Nb = _choose_batch_block(N, C, H, W)
    grid = (N // Nb,)

    kernel = make_blur_kernel(Nb, C, H, W)

    return pl.pallas_call(
        kernel,
        out_shape=jax.ShapeDtypeStruct((N, 1, Ho, Wo), psfs.dtype),
        grid=grid,
        in_specs=[
            pl.BlockSpec(memory_space=pltpu.MemorySpace.SMEM),      # horizontal taps
            pl.BlockSpec(memory_space=pltpu.MemorySpace.SMEM),      # vertical taps
            pl.BlockSpec((Nb, C, H, W), lambda b: (b, 0, 0, 0)),    # input block
        ],
        out_specs=pl.BlockSpec((Nb, 1, Ho, Wo), lambda b: (b, 0, 0, 0)),
        scratch_shapes=[pltpu.VMEM((Nb, C, Hp, Wp), jnp.float32)],
        compiler_params=pltpu.CompilerParams(
            dimension_semantics=("parallel",),
            vmem_limit_bytes=32 * 1024 * 1024,
        ),
    )(u_taps.reshape(-1), v_taps.reshape(-1), psfs)


# TODO(synk): MaskPhasesToPSFs (batched complex 2D FFT custom Function), Croplayer,
# NoiseLayer (host-side np.random.poisson + read-noise RNG) and Normalize01 from
# PhysicalLayer are not translated here; only the BlurLayer convolution (the dense
# compute stage) is implemented as a Pallas kernel.


if __name__ == "__main__":
    key = jax.random.PRNGKey(0)
    k_psf, k_std = jax.random.split(key)

    # Small shapes: batch=2, Nemitters(channels)=4, spatial=16
    N, C, H, W = 2, 4, 16, 16
    psfs = jax.random.uniform(k_psf, (N, C, H, W), dtype=jnp.float32)

    std_min, std_max = 0.5, 1.5            # setup_params['blur_std_range']
    stds = sample_blur_stds(k_std, C, std_min, std_max)

    u_taps, v_taps = separable_blur_taps(stds)
    out = blur_forward(psfs, u_taps, v_taps)
    out = jax.block_until_ready(out)
    assert out.shape == (N, 1, H - 4, W - 4), out.shape

    # Reference: dense weights built exactly like the PyTorch module, run through
    # XLA's conv (cross-correlation, identical to F.conv2d with padding=2).
    w2d = dense_blur_weights(stds)
    ref = lax.conv_general_dilated(
        psfs, w2d[None, :, :, :],
        window_strides=(1, 1), padding=((PAD, PAD), (PAD, PAD)),
        dimension_numbers=("NCHW", "OIHW", "NCHW"))
    np.testing.assert_allclose(np.asarray(out), np.asarray(ref), rtol=1e-4, atol=1e-6)

    print("KERNEL_OK")
</pallas_src>

<mosaic_0001>
module attributes {stable_mosaic.version = 11 : i64} {
  func.func @kernel(%arg0: i32, %arg1: memref<36xf32, #tpu.memory_space<smem>>, %arg2: memref<36xf32, #tpu.memory_space<smem>>, %arg3: memref<1x4x16x16xf32, #tpu.memory_space<vmem>>, %arg4: memref<1x1x12x12xf32, #tpu.memory_space<vmem>>, %arg5: memref<1x4x20x20xf32, #tpu.memory_space<vmem>>) attributes {dimension_semantics = [#tpu.dimension_semantics<parallel>], iteration_bounds = array<i64: 2>, scalar_prefetch = 0 : i64, scratch_operands = 1 : i64, tpu.core_type = #tpu.core_type<tc>, window_params = [{transform_indices = @transform_0, window_bounds = array<i64: 36>}, {transform_indices = @transform_1, window_bounds = array<i64: 36>}, {transform_indices = @transform_2, window_bounds = array<i64: 1, 4, 16, 16>}, {transform_indices = @transform_3, window_bounds = array<i64: 1, 1, 12, 12>}]} {
    %cst = arith.constant 0.000000e+00 : f32
    %0 = vector.broadcast %cst : f32 to vector<1x4x2x20xf32>
    %c0 = arith.constant 0 : index
    %c0_0 = arith.constant 0 : index
    %c0_1 = arith.constant 0 : index
    %c0_2 = arith.constant 0 : index
    %1 = vector.load %arg5[%c0, %c0_0, %c0_1, %c0_2] : memref<1x4x20x20xf32, #tpu.memory_space<vmem>>, vector<1x4x2x20xf32>
    tpu.vector_store %arg5[%c0, %c0_0, %c0_1, %c0_2], %0 {strides = array<i32>} : memref<1x4x20x20xf32, #tpu.memory_space<vmem>>, vector<1x4x2x20xf32>,
    %cst_3 = arith.constant 0.000000e+00 : f32
    %2 = vector.broadcast %cst_3 : f32 to vector<1x4x2x20xf32>
    %c0_4 = arith.constant 0 : index
    %c0_5 = arith.constant 0 : index
    %c18 = arith.constant 18 : index
    %c0_6 = arith.constant 0 : index
    %3 = vector.load %arg5[%c0_4, %c0_5, %c18, %c0_6] : memref<1x4x20x20xf32, #tpu.memory_space<vmem>>, vector<1x4x2x20xf32>
    tpu.vector_store %arg5[%c0_4, %c0_5, %c18, %c0_6], %2 {strides = array<i32>} : memref<1x4x20x20xf32, #tpu.memory_space<vmem>>, vector<1x4x2x20xf32>,
    %cst_7 = arith.constant 0.000000e+00 : f32
    %4 = vector.broadcast %cst_7 : f32 to vector<1x4x20x2xf32>
    %c0_8 = arith.constant 0 : index
    %c0_9 = arith.constant 0 : index
    %c0_10 = arith.constant 0 : index
    %c0_11 = arith.constant 0 : index
    %5 = vector.load %arg5[%c0_8, %c0_9, %c0_10, %c0_11] : memref<1x4x20x20xf32, #tpu.memory_space<vmem>>, vector<1x4x20x2xf32>
    tpu.vector_store %arg5[%c0_8, %c0_9, %c0_10, %c0_11], %4 {strides = array<i32>} : memref<1x4x20x20xf32, #tpu.memory_space<vmem>>, vector<1x4x20x2xf32>,
    %cst_12 = arith.constant 0.000000e+00 : f32
    %6 = vector.broadcast %cst_12 : f32 to vector<1x4x20x2xf32>
    %c0_13 = arith.constant 0 : index
    %c0_14 = arith.constant 0 : index
    %c0_15 = arith.constant 0 : index
    %c18_16 = arith.constant 18 : index
    %7 = vector.load %arg5[%c0_13, %c0_14, %c0_15, %c18_16] : memref<1x4x20x20xf32, #tpu.memory_space<vmem>>, vector<1x4x20x2xf32>
    tpu.vector_store %arg5[%c0_13, %c0_14, %c0_15, %c18_16], %6 {strides = array<i32>} : memref<1x4x20x20xf32, #tpu.memory_space<vmem>>, vector<1x4x20x2xf32>,
    %c0_17 = arith.constant 0 : index
    %c0_18 = arith.constant 0 : index
    %c0_19 = arith.constant 0 : index
    %c0_20 = arith.constant 0 : index
    %8 = vector.load %arg3[%c0_17, %c0_18, %c0_19, %c0_20] : memref<1x4x16x16xf32, #tpu.memory_space<vmem>>, vector<1x4x16x16xf32>
    %c0_21 = arith.constant 0 : index
    %c0_22 = arith.constant 0 : index
    %c2 = arith.constant 2 : index
    %c2_23 = arith.constant 2 : index
    %9 = vector.load %arg5[%c0_21, %c0_22, %c2, %c2_23] : memref<1x4x20x20xf32, #tpu.memory_space<vmem>>, vector<1x4x16x16xf32>
    tpu.vector_store %arg5[%c0_21, %c0_22, %c2, %c2_23], %8 {strides = array<i32>} : memref<1x4x20x20xf32, #tpu.memory_space<vmem>>, vector<1x4x16x16xf32>,
    %cst_24 = arith.constant 0.000000e+00 : f32
    %10 = vector.broadcast %cst_24 : f32 to vector<1x12x12xf32>
    %c0_25 = arith.constant 0 : index
    %11 = memref.load %arg1[%c0_25] : memref<36xf32, #tpu.memory_space<smem>>
    %c1 = arith.constant 1 : index
    %12 = memref.load %arg1[%c1] : memref<36xf32, #tpu.memory_space<smem>>
    %c2_26 = arith.constant 2 : index
    %13 = memref.load %arg1[%c2_26] : memref<36xf32, #tpu.memory_space<smem>>
    %c3 = arith.constant 3 : index
    %14 = memref.load %arg1[%c3] : memref<36xf32, #tpu.memory_space<smem>>
    %c4 = arith.constant 4 : index
    %15 = memref.load %arg1[%c4] : memref<36xf32, #tpu.memory_space<smem>>
    %c5 = arith.constant 5 : index
    %16 = memref.load %arg1[%c5] : memref<36xf32, #tpu.memory_space<smem>>
    %c6 = arith.constant 6 : index
    %17 = memref.load %arg1[%c6] : memref<36xf32, #tpu.memory_space<smem>>
    %c7 = arith.constant 7 : index
    %18 = memref.load %arg1[%c7] : memref<36xf32, #tpu.memory_space<smem>>
    %c8 = arith.constant 8 : index
    %19 = memref.load %arg1[%c8] : memref<36xf32, #tpu.memory_space<smem>>
    %c0_27 = arith.constant 0 : index
    %20 = memref.load %arg2[%c0_27] : memref<36xf32, #tpu.memory_space<smem>>
    %c1_28 = arith.constant 1 : index
    %21 = memref.load %arg2[%c1_28] : memref<36xf32, #tpu.memory_space<smem>>
    %c2_29 = arith.constant 2 : index
    %22 = memref.load %arg2[%c2_29] : memref<36xf32, #tpu.memory_space<smem>>
    %c3_30 = arith.constant 3 : index
    %23 = memref.load %arg2[%c3_30] : memref<36xf32, #tpu.memory_space<smem>>
    %c4_31 = arith.constant 4 : index
    %24 = memref.load %arg2[%c4_31] : memref<36xf32, #tpu.memory_space<smem>>
    %c5_32 = arith.constant 5 : index
    %25 = memref.load %arg2[%c5_32] : memref<36xf32, #tpu.memory_space<smem>>
    %c6_33 = arith.constant 6 : index
    %26 = memref.load %arg2[%c6_33] : memref<36xf32, #tpu.memory_space<smem>>
    %c7_34 = arith.constant 7 : index
    %27 = memref.load %arg2[%c7_34] : memref<36xf32, #tpu.memory_space<smem>>
    %c8_35 = arith.constant 8 : index
    %28 = memref.load %arg2[%c8_35] : memref<36xf32, #tpu.memory_space<smem>>
    %c0_36 = arith.constant 0 : index
    %c0_37 = arith.constant 0 : index
    %c0_38 = arith.constant 0 : index
    %c0_39 = arith.constant 0 : index
    %29 = vector.load %arg5[%c0_36, %c0_37, %c0_38, %c0_39] : memref<1x4x20x20xf32, #tpu.memory_space<vmem>>, vector<1x1x20x20xf32>
    %30 = vector.shape_cast %29 : vector<1x1x20x20xf32> to vector<1x20x20xf32>
    %31 = vector.extract_strided_slice %30 {offsets = [0, 0, 0], sizes = [1, 20, 12], strides = [1, 1, 1]} : vector<1x20x20xf32> to vector<1x20x12xf32>
    %32 = vector.broadcast %11 : f32 to vector<1x20x12xf32>
    %33 = arith.mulf %31, %32 : vector<1x20x12xf32>
    %34 = vector.extract_strided_slice %30 {offsets = [0, 0, 1], sizes = [1, 20, 12], strides = [1, 1, 1]} : vector<1x20x20xf32> to vector<1x20x12xf32>
    %35 = vector.broadcast %12 : f32 to vector<1x20x12xf32>
    %36 = arith.mulf %34, %35 : vector<1x20x12xf32>
    %37 = arith.addf %33, %36 : vector<1x20x12xf32>
    %38 = vector.extract_strided_slice %30 {offsets = [0, 0, 2], sizes = [1, 20, 12], strides = [1, 1, 1]} : vector<1x20x20xf32> to vector<1x20x12xf32>
    %39 = vector.broadcast %13 : f32 to vector<1x20x12xf32>
    %40 = arith.mulf %38, %39 : vector<1x20x12xf32>
    %41 = arith.addf %37, %40 : vector<1x20x12xf32>
    %42 = vector.extract_strided_slice %30 {offsets = [0, 0, 3], sizes = [1, 20, 12], strides = [1, 1, 1]} : vector<1x20x20xf32> to vector<1x20x12xf32>
    %43 = vector.broadcast %14 : f32 to vector<1x20x12xf32>
    %44 = arith.mulf %42, %43 : vector<1x20x12xf32>
    %45 = arith.addf %41, %44 : vector<1x20x12xf32>
    %46 = vector.extract_strided_slice %30 {offsets = [0, 0, 4], sizes = [1, 20, 12], strides = [1, 1, 1]} : vector<1x20x20xf32> to vector<1x20x12xf32>
    %47 = vector.broadcast %15 : f32 to vector<1x20x12xf32>
    %48 = arith.mulf %46, %47 : vector<1x20x12xf32>
    %49 = arith.addf %45, %48 : vector<1x20x12xf32>
    %50 = vector.extract_strided_slice %30 {offsets = [0, 0, 5], sizes = [1, 20, 12], strides = [1, 1, 1]} : vector<1x20x20xf32> to vector<1x20x12xf32>
    %51 = vector.broadcast %16 : f32 to vector<1x20x12xf32>
    %52 = arith.mulf %50, %51 : vector<1x20x12xf32>
    %53 = arith.addf %49, %52 : vector<1x20x12xf32>
    %54 = vector.extract_strided_slice %30 {offsets = [0, 0, 6], sizes = [1, 20, 12], strides = [1, 1, 1]} : vector<1x20x20xf32> to vector<1x20x12xf32>
    %55 = vector.broadcast %17 : f32 to vector<1x20x12xf32>
    %56 = arith.mulf %54, %55 : vector<1x20x12xf32>
    %57 = arith.addf %53, %56 : vector<1x20x12xf32>
    %58 = vector.extract_strided_slice %30 {offsets = [0, 0, 7], sizes = [1, 20, 12], strides = [1, 1, 1]} : vector<1x20x20xf32> to vector<1x20x12xf32>
    %59 = vector.broadcast %18 : f32 to vector<1x20x12xf32>
    %60 = arith.mulf %58, %59 : vector<1x20x12xf32>
    %61 = arith.addf %57, %60 : vector<1x20x12xf32>
    %62 = vector.extract_strided_slice %30 {offsets = [0, 0, 8], sizes = [1, 20, 12], strides = [1, 1, 1]} : vector<1x20x20xf32> to vector<1x20x12xf32>
    %63 = vector.broadcast %19 : f32 to vector<1x20x12xf32>
    %64 = arith.mulf %62, %63 : vector<1x20x12xf32>
    %65 = arith.addf %61, %64 : vector<1x20x12xf32>
    %66 = vector.extract_strided_slice %65 {offsets = [0, 0, 0], sizes = [1, 12, 12], strides = [1, 1, 1]} : vector<1x20x12xf32> to vector<1x12x12xf32>
    %67 = vector.broadcast %20 : f32 to vector<1x12x12xf32>
    %68 = arith.mulf %66, %67 : vector<1x12x12xf32>
    %69 = arith.addf %10, %68 : vector<1x12x12xf32>
    %70 = vector.extract_strided_slice %65 {offsets = [0, 1, 0], sizes = [1, 12, 12], strides = [1, 1, 1]} : vector<1x20x12xf32> to vector<1x12x12xf32>
    %71 = vector.broadcast %21 : f32 to vector<1x12x12xf32>
    %72 = arith.mulf %70, %71 : vector<1x12x12xf32>
    %73 = arith.addf %69, %72 : vector<1x12x12xf32>
    %74 = vector.extract_strided_slice %65 {offsets = [0, 2, 0], sizes = [1, 12, 12], strides = [1, 1, 1]} : vector<1x20x12xf32> to vector<1x12x12xf32>
    %75 = vector.broadcast %22 : f32 to vector<1x12x12xf32>
    %76 = arith.mulf %74, %75 : vector<1x12x12xf32>
    %77 = arith.addf %73, %76 : vector<1x12x12xf32>
    %78 = vector.extract_strided_slice %65 {offsets = [0, 3, 0], sizes = [1, 12, 12], strides = [1, 1, 1]} : vector<1x20x12xf32> to vector<1x12x12xf32>
    %79 = vector.broadcast %23 : f32 to vector<1x12x12xf32>
    %80 = arith.mulf %78, %79 : vector<1x12x12xf32>
    %81 = arith.addf %77, %80 : vector<1x12x12xf32>
    %82 = vector.extract_strided_slice %65 {offsets = [0, 4, 0], sizes = [1, 12, 12], strides = [1, 1, 1]} : vector<1x20x12xf32> to vector<1x12x12xf32>
    %83 = vector.broadcast %24 : f32 to vector<1x12x12xf32>
    %84 = arith.mulf %82, %83 : vector<1x12x12xf32>
    %85 = arith.addf %81, %84 : vector<1x12x12xf32>
    %86 = vector.extract_strided_slice %65 {offsets = [0, 5, 0], sizes = [1, 12, 12], strides = [1, 1, 1]} : vector<1x20x12xf32> to vector<1x12x12xf32>
    %87 = vector.broadcast %25 : f32 to vector<1x12x12xf32>
    %88 = arith.mulf %86, %87 : vector<1x12x12xf32>
    %89 = arith.addf %85, %88 : vector<1x12x12xf32>
    %90 = vector.extract_strided_slice %65 {offsets = [0, 6, 0], sizes = [1, 12, 12], strides = [1, 1, 1]} : vector<1x20x12xf32> to vector<1x12x12xf32>
    %91 = vector.broadcast %26 : f32 to vector<1x12x12xf32>
    %92 = arith.mulf %90, %91 : vector<1x12x12xf32>
    %93 = arith.addf %89, %92 : vector<1x12x12xf32>
    %94 = vector.extract_strided_slice %65 {offsets = [0, 7, 0], sizes = [1, 12, 12], strides = [1, 1, 1]} : vector<1x20x12xf32> to vector<1x12x12xf32>
    %95 = vector.broadcast %27 : f32 to vector<1x12x12xf32>
    %96 = arith.mulf %94, %95 : vector<1x12x12xf32>
    %97 = arith.addf %93, %96 : vector<1x12x12xf32>
    %98 = vector.extract_strided_slice %65 {offsets = [0, 8, 0], sizes = [1, 12, 12], strides = [1, 1, 1]} : vector<1x20x12xf32> to vector<1x12x12xf32>
    %99 = vector.broadcast %28 : f32 to vector<1x12x12xf32>
    %100 = arith.mulf %98, %99 : vector<1x12x12xf32>
    %101 = arith.addf %97, %100 : vector<1x12x12xf32>
    %c9 = arith.constant 9 : index
    %102 = memref.load %arg1[%c9] : memref<36xf32, #tpu.memory_space<smem>>
    %c10 = arith.constant 10 : index
    %103 = memref.load %arg1[%c10] : memref<36xf32, #tpu.memory_space<smem>>
    %c11 = arith.constant 11 : index
    %104 = memref.load %arg1[%c11] : memref<36xf32, #tpu.memory_space<smem>>
    %c12 = arith.constant 12 : index
    %105 = memref.load %arg1[%c12] : memref<36xf32, #tpu.memory_space<smem>>
    %c13 = arith.constant 13 : index
    %106 = memref.load %arg1[%c13] : memref<36xf32, #tpu.memory_space<smem>>
    %c14 = arith.constant 14 : index
    %107 = memref.load %arg1[%c14] : memref<36xf32, #tpu.memory_space<smem>>
    %c15 = arith.constant 15 : index
    %108 = memref.load %arg1[%c15] : memref<36xf32, #tpu.memory_space<smem>>
    %c16 = arith.constant 16 : index
    %109 = memref.load %arg1[%c16] : memref<36xf32, #tpu.memory_space<smem>>
    %c17 = arith.constant 17 : index
    %110 = memref.load %arg1[%c17] : memref<36xf32, #tpu.memory_space<smem>>
    %c9_40 = arith.constant 9 : index
    %111 = memref.load %arg2[%c9_40] : memref<36xf32, #tpu.memory_space<smem>>
    %c10_41 = arith.constant 10 : index
    %112 = memref.load %arg2[%c10_41] : memref<36xf32, #tpu.memory_space<smem>>
    %c11_42 = arith.constant 11 : index
    %113 = memref.load %arg2[%c11_42] : memref<36xf32, #tpu.memory_space<smem>>
    %c12_43 = arith.constant 12 : index
    %114 = memref.load %arg2[%c12_43] : memref<36xf32, #tpu.memory_space<smem>>
    %c13_44 = arith.constant 13 : index
    %115 = memref.load %arg2[%c13_44] : memref<36xf32, #tpu.memory_space<smem>>
    %c14_45 = arith.constant 14 : index
    %116 = memref.load %arg2[%c14_45] : memref<36xf32, #tpu.memory_space<smem>>
    %c15_46 = arith.constant 15 : index
    %117 = memref.load %arg2[%c15_46] : memref<36xf32, #tpu.memory_space<smem>>
    %c16_47 = arith.constant 16 : index
    %118 = memref.load %arg2[%c16_47] : memref<36xf32, #tpu.memory_space<smem>>
    %c17_48 = arith.constant 17 : index
    %119 = memref.load %arg2[%c17_48] : memref<36xf32, #tpu.memory_space<smem>>
    %c0_49 = arith.constant 0 : index
    %c1_50 = arith.constant 1 : index
    %c0_51 = arith.constant 0 : index
    %c0_52 = arith.constant 0 : index
    %120 = vector.load %arg5[%c0_49, %c1_50, %c0_51, %c0_52] : memref<1x4x20x20xf32, #tpu.memory_space<vmem>>, vector<1x1x20x20xf32>
    %121 = vector.shape_cast %120 : vector<1x1x20x20xf32> to vector<1x20x20xf32>
    %122 = vector.extract_strided_slice %121 {offsets = [0, 0, 0], sizes = [1, 20, 12], strides = [1, 1, 1]} : vector<1x20x20xf32> to vector<1x20x12xf32>
    %123 = vector.broadcast %102 : f32 to vector<1x20x12xf32>
    %124 = arith.mulf %122, %123 : vector<1x20x12xf32>
    %125 = vector.extract_strided_slice %121 {offsets = [0, 0, 1], sizes = [1, 20, 12], strides = [1, 1, 1]} : vector<1x20x20xf32> to vector<1x20x12xf32>
    %126 = vector.broadcast %103 : f32 to vector<1x20x12xf32>
    %127 = arith.mulf %125, %126 : vector<1x20x12xf32>
    %128 = arith.addf %124, %127 : vector<1x20x12xf32>
    %129 = vector.extract_strided_slice %121 {offsets = [0, 0, 2], sizes = [1, 20, 12], strides = [1, 1, 1]} : vector<1x20x20xf32> to vector<1x20x12xf32>
    %130 = vector.broadcast %104 : f32 to vector<1x20x12xf32>
    %131 = arith.mulf %129, %130 : vector<1x20x12xf32>
    %132 = arith.addf %128, %131 : vector<1x20x12xf32>
    %133 = vector.extract_strided_slice %121 {offsets = [0, 0, 3], sizes = [1, 20, 12], strides = [1, 1, 1]} : vector<1x20x20xf32> to vector<1x20x12xf32>
    %134 = vector.broadcast %105 : f32 to vector<1x20x12xf32>
    %135 = arith.mulf %133, %134 : vector<1x20x12xf32>
    %136 = arith.addf %132, %135 : vector<1x20x12xf32>
    %137 = vector.extract_strided_slice %121 {offsets = [0, 0, 4], sizes = [1, 20, 12], strides = [1, 1, 1]} : vector<1x20x20xf32> to vector<1x20x12xf32>
    %138 = vector.broadcast %106 : f32 to vector<1x20x12xf32>
    %139 = arith.mulf %137, %138 : vector<1x20x12xf32>
    %140 = arith.addf %136, %139 : vector<1x20x12xf32>
    %141 = vector.extract_strided_slice %121 {offsets = [0, 0, 5], sizes = [1, 20, 12], strides = [1, 1, 1]} : vector<1x20x20xf32> to vector<1x20x12xf32>
    %142 = vector.broadcast %107 : f32 to vector<1x20x12xf32>
    %143 = arith.mulf %141, %142 : vector<1x20x12xf32>
    %144 = arith.addf %140, %143 : vector<1x20x12xf32>
    %145 = vector.extract_strided_slice %121 {offsets = [0, 0, 6], sizes = [1, 20, 12], strides = [1, 1, 1]} : vector<1x20x20xf32> to vector<1x20x12xf32>
    %146 = vector.broadcast %108 : f32 to vector<1x20x12xf32>
    %147 = arith.mulf %145, %146 : vector<1x20x12xf32>
    %148 = arith.addf %144, %147 : vector<1x20x12xf32>
    %149 = vector.extract_strided_slice %121 {offsets = [0, 0, 7], sizes = [1, 20, 12], strides = [1, 1, 1]} : vector<1x20x20xf32> to vector<1x20x12xf32>
    %150 = vector.broadcast %109 : f32 to vector<1x20x12xf32>
    %151 = arith.mulf %149, %150 : vector<1x20x12xf32>
    %152 = arith.addf %148, %151 : vector<1x20x12xf32>
    %153 = vector.extract_strided_slice %121 {offsets = [0, 0, 8], sizes = [1, 20, 12], strides = [1, 1, 1]} : vector<1x20x20xf32> to vector<1x20x12xf32>
    %154 = vector.broadcast %110 : f32 to vector<1x20x12xf32>
    %155 = arith.mulf %153, %154 : vector<1x20x12xf32>
    %156 = arith.addf %152, %155 : vector<1x20x12xf32>
    %157 = vector.extract_strided_slice %156 {offsets = [0, 0, 0], sizes = [1, 12, 12], strides = [1, 1, 1]} : vector<1x20x12xf32> to vector<1x12x12xf32>
    %158 = vector.broadcast %111 : f32 to vector<1x12x12xf32>
    %159 = arith.mulf %157, %158 : vector<1x12x12xf32>
    %160 = arith.addf %101, %159 : vector<1x12x12xf32>
    %161 = vector.extract_strided_slice %156 {offsets = [0, 1, 0], sizes = [1, 12, 12], strides = [1, 1, 1]} : vector<1x20x12xf32> to vector<1x12x12xf32>
    %162 = vector.broadcast %112 : f32 to vector<1x12x12xf32>
    %163 = arith.mulf %161, %162 : vector<1x12x12xf32>
    %164 = arith.addf %160, %163 : vector<1x12x12xf32>
    %165 = vector.extract_strided_slice %156 {offsets = [0, 2, 0], sizes = [1, 12, 12], strides = [1, 1, 1]} : vector<1x20x12xf32> to vector<1x12x12xf32>
    %166 = vector.broadcast %113 : f32 to vector<1x12x12xf32>
    %167 = arith.mulf %165, %166 : vector<1x12x12xf32>
    %168 = arith.addf %164, %167 : vector<1x12x12xf32>
    %169 = vector.extract_strided_slice %156 {offsets = [0, 3, 0], sizes = [1, 12, 12], strides = [1, 1, 1]} : vector<1x20x12xf32> to vector<1x12x12xf32>
    %170 = vector.broadcast %114 : f32 to vector<1x12x12xf32>
    %171 = arith.mulf %169, %170 : vector<1x12x12xf32>
    %172 = arith.addf %168, %171 : vector<1x12x12xf32>
    %173 = vector.extract_strided_slice %156 {offsets = [0, 4, 0], sizes = [1, 12, 12], strides = [1, 1, 1]} : vector<1x20x12xf32> to vector<1x12x12xf32>
    %174 = vector.broadcast %115 : f32 to vector<1x12x12xf32>
    %175 = arith.mulf %173, %174 : vector<1x12x12xf32>
    %176 = arith.addf %172, %175 : vector<1x12x12xf32>
    %177 = vector.extract_strided_slice %156 {offsets = [0, 5, 0], sizes = [1, 12, 12], strides = [1, 1, 1]} : vector<1x20x12xf32> to vector<1x12x12xf32>
    %178 = vector.broadcast %116 : f32 to vector<1x12x12xf32>
    %179 = arith.mulf %177, %178 : vector<1x12x12xf32>
    %180 = arith.addf %176, %179 : vector<1x12x12xf32>
    %181 = vector.extract_strided_slice %156 {offsets = [0, 6, 0], sizes = [1, 12, 12], strides = [1, 1, 1]} : vector<1x20x12xf32> to vector<1x12x12xf32>
    %182 = vector.broadcast %117 : f32 to vector<1x12x12xf32>
    %183 = arith.mulf %181, %182 : vector<1x12x12xf32>
    %184 = arith.addf %180, %183 : vector<1x12x12xf32>
    %185 = vector.extract_strided_slice %156 {offsets = [0, 7, 0], sizes = [1, 12, 12], strides = [1, 1, 1]} : vector<1x20x12xf32> to vector<1x12x12xf32>
    %186 = vector.broadcast %118 : f32 to vector<1x12x12xf32>
    %187 = arith.mulf %185, %186 : vector<1x12x12xf32>
    %188 = arith.addf %184, %187 : vector<1x12x12xf32>
    %189 = vector.extract_strided_slice %156 {offsets = [0, 8, 0], sizes = [1, 12, 12], strides = [1, 1, 1]} : vector<1x20x12xf32> to vector<1x12x12xf32>
    %190 = vector.broadcast %119 : f32 to vector<1x12x12xf32>
    %191 = arith.mulf %189, %190 : vector<1x12x12xf32>
    %192 = arith.addf %188, %191 : vector<1x12x12xf32>
    %c18_53 = arith.constant 18 : index
    %193 = memref.load %arg1[%c18_53] : memref<36xf32, #tpu.memory_space<smem>>
    %c19 = arith.constant 19 : index
    %194 = memref.load %arg1[%c19] : memref<36xf32, #tpu.memory_space<smem>>
    %c20 = arith.constant 20 : index
    %195 = memref.load %arg1[%c20] : memref<36xf32, #tpu.memory_space<smem>>
    %c21 = arith.constant 21 : index
    %196 = memref.load %arg1[%c21] : memref<36xf32, #tpu.memory_space<smem>>
    %c22 = arith.constant 22 : index
    %197 = memref.load %arg1[%c22] : memref<36xf32, #tpu.memory_space<smem>>
    %c23 = arith.constant 23 : index
    %198 = memref.load %arg1[%c23] : memref<36xf32, #tpu.memory_space<smem>>
    %c24 = arith.constant 24 : index
    %199 = memref.load %arg1[%c24] : memref<36xf32, #tpu.memory_space<smem>>
    %c25 = arith.constant 25 : index
    %200 = memref.load %arg1[%c25] : memref<36xf32, #tpu.memory_space<smem>>
    %c26 = arith.constant 26 : index
    %201 = memref.load %arg1[%c26] : memref<36xf32, #tpu.memory_space<smem>>
    %c18_54 = arith.constant 18 : index
    %202 = memref.load %arg2[%c18_54] : memref<36xf32, #tpu.memory_space<smem>>
    %c19_55 = arith.constant 19 : index
    %203 = memref.load %arg2[%c19_55] : memref<36xf32, #tpu.memory_space<smem>>
    %c20_56 = arith.constant 20 : index
    %204 = memref.load %arg2[%c20_56] : memref<36xf32, #tpu.memory_space<smem>>
    %c21_57 = arith.constant 21 : index
    %205 = memref.load %arg2[%c21_57] : memref<36xf32, #tpu.memory_space<smem>>
    %c22_58 = arith.constant 22 : index
    %206 = memref.load %arg2[%c22_58] : memref<36xf32, #tpu.memory_space<smem>>
    %c23_59 = arith.constant 23 : index
    %207 = memref.load %arg2[%c23_59] : memref<36xf32, #tpu.memory_space<smem>>
    %c24_60 = arith.constant 24 : index
    %208 = memref.load %arg2[%c24_60] : memref<36xf32, #tpu.memory_space<smem>>
    %c25_61 = arith.constant 25 : index
    %209 = memref.load %arg2[%c25_61] : memref<36xf32, #tpu.memory_space<smem>>
    %c26_62 = arith.constant 26 : index
    %210 = memref.load %arg2[%c26_62] : memref<36xf32, #tpu.memory_space<smem>>
    %c0_63 = arith.constant 0 : index
    %c2_64 = arith.constant 2 : index
    %c0_65 = arith.constant 0 : index
    %c0_66 = arith.constant 0 : index
    %211 = vector.load %arg5[%c0_63, %c2_64, %c0_65, %c0_66] : memref<1x4x20x20xf32, #tpu.memory_space<vmem>>, vector<1x1x20x20xf32>
    %212 = vector.shape_cast %211 : vector<1x1x20x20xf32> to vector<1x20x20xf32>
    %213 = vector.extract_strided_slice %212 {offsets = [0, 0, 0], sizes = [1, 20, 12], strides = [1, 1, 1]} : vector<1x20x20xf32> to vector<1x20x12xf32>
    %214 = vector.broadcast %193 : f32 to vector<1x20x12xf32>
    %215 = arith.mulf %213, %214 : vector<1x20x12xf32>
    %216 = vector.extract_strided_slice %212 {offsets = [0, 0, 1], sizes = [1, 20, 12], strides = [1, 1, 1]} : vector<1x20x20xf32> to vector<1x20x12xf32>
    %217 = vector.broadcast %194 : f32 to vector<1x20x12xf32>
    %218 = arith.mulf %216, %217 : vector<1x20x12xf32>
    %219 = arith.addf %215, %218 : vector<1x20x12xf32>
    %220 = vector.extract_strided_slice %212 {offsets = [0, 0, 2], sizes = [1, 20, 12], strides = [1, 1, 1]} : vector<1x20x20xf32> to vector<1x20x12xf32>
    %221 = vector.broadcast %195 : f32 to vector<1x20x12xf32>
    %222 = arith.mulf %220, %221 : vector<1x20x12xf32>
    %223 = arith.addf %219, %222 : vector<1x20x12xf32>
    %224 = vector.extract_strided_slice %212 {offsets = [0, 0, 3], sizes = [1, 20, 12], strides = [1, 1, 1]} : vector<1x20x20xf32> to vector<1x20x12xf32>
    %225 = vector.broadcast %196 : f32 to vector<1x20x12xf32>
    %226 = arith.mulf %224, %225 : vector<1x20x12xf32>
    %227 = arith.addf %223, %226 : vector<1x20x12xf32>
    %228 = vector.extract_strided_slice %212 {offsets = [0, 0, 4], sizes = [1, 20, 12], strides = [1, 1, 1]} : vector<1x20x20xf32> to vector<1x20x12xf32>
    %229 = vector.broadcast %197 : f32 to vector<1x20x12xf32>
    %230 = arith.mulf %228, %229 : vector<1x20x12xf32>
    %231 = arith.addf %227, %230 : vector<1x20x12xf32>
    %232 = vector.extract_strided_slice %212 {offsets = [0, 0, 5], sizes = [1, 20, 12], strides = [1, 1, 1]} : vector<1x20x20xf32> to vector<1x20x12xf32>
    %233 = vector.broadcast %198 : f32 to vector<1x20x12xf32>
    %234 = arith.mulf %232, %233 : vector<1x20x12xf32>
    %235 = arith.addf %231, %234 : vector<1x20x12xf32>
    %236 = vector.extract_strided_slice %212 {offsets = [0, 0, 6], sizes = [1, 20, 12], strides = [1, 1, 1]} : vector<1x20x20xf32> to vector<1x20x12xf32>
    %237 = vector.broadcast %199 : f32 to vector<1x20x12xf32>
    %238 = arith.mulf %236, %237 : vector<1x20x12xf32>
    %239 = arith.addf %235, %238 : vector<1x20x12xf32>
    %240 = vector.extract_strided_slice %212 {offsets = [0, 0, 7], sizes = [1, 20, 12], strides = [1, 1, 1]} : vector<1x20x20xf32> to vector<1x20x12xf32>
    %241 = vector.broadcast %200 : f32 to vector<1x20x12xf32>
    %242 = arith.mulf %240, %241 : vector<1x20x12xf32>
    %243 = arith.addf %239, %242 : vector<1x20x12xf32>
    %244 = vector.extract_strided_slice %212 {offsets = [0, 0, 8], sizes = [1, 20, 12], strides = [1, 1, 1]} : vector<1x20x20xf32> to vector<1x20x12xf32>
    %245 = vector.broadcast %201 : f32 to vector<1x20x12xf32>
    %246 = arith.mulf %244, %245 : vector<1x20x12xf32>
    %247 = arith.addf %243, %246 : vector<1x20x12xf32>
    %248 = vector.extract_strided_slice %247 {offsets = [0, 0, 0], sizes = [1, 12, 12], strides = [1, 1, 1]} : vector<1x20x12xf32> to vector<1x12x12xf32>
    %249 = vector.broadcast %202 : f32 to vector<1x12x12xf32>
    %250 = arith.mulf %248, %249 : vector<1x12x12xf32>
    %251 = arith.addf %192, %250 : vector<1x12x12xf32>
    %252 = vector.extract_strided_slice %247 {offsets = [0, 1, 0], sizes = [1, 12, 12], strides = [1, 1, 1]} : vector<1x20x12xf32> to vector<1x12x12xf32>
    %253 = vector.broadcast %203 : f32 to vector<1x12x12xf32>
    %254 = arith.mulf %252, %253 : vector<1x12x12xf32>
    %255 = arith.addf %251, %254 : vector<1x12x12xf32>
    %256 = vector.extract_strided_slice %247 {offsets = [0, 2, 0], sizes = [1, 12, 12], strides = [1, 1, 1]} : vector<1x20x12xf32> to vector<1x12x12xf32>
    %257 = vector.broadcast %204 : f32 to vector<1x12x12xf32>
    %258 = arith.mulf %256, %257 : vector<1x12x12xf32>
    %259 = arith.addf %255, %258 : vector<1x12x12xf32>
    %260 = vector.extract_strided_slice %247 {offsets = [0, 3, 0], sizes = [1, 12, 12], strides = [1, 1, 1]} : vector<1x20x12xf32> to vector<1x12x12xf32>
    %261 = vector.broadcast %205 : f32 to vector<1x12x12xf32>
    %262 = arith.mulf %260, %261 : vector<1x12x12xf32>
    %263 = arith.addf %259, %262 : vector<1x12x12xf32>
    %264 = vector.extract_strided_slice %247 {offsets = [0, 4, 0], sizes = [1, 12, 12], strides = [1, 1, 1]} : vector<1x20x12xf32> to vector<1x12x12xf32>
    %265 = vector.broadcast %206 : f32 to vector<1x12x12xf32>
    %266 = arith.mulf %264, %265 : vector<1x12x12xf32>
    %267 = arith.addf %263, %266 : vector<1x12x12xf32>
    %268 = vector.extract_strided_slice %247 {offsets = [0, 5, 0], sizes = [1, 12, 12], strides = [1, 1, 1]} : vector<1x20x12xf32> to vector<1x12x12xf32>
    %269 = vector.broadcast %207 : f32 to vector<1x12x12xf32>
    %270 = arith.mulf %268, %269 : vector<1x12x12xf32>
    %271 = arith.addf %267, %270 : vector<1x12x12xf32>
    %272 = vector.extract_strided_slice %247 {offsets = [0, 6, 0], sizes = [1, 12, 12], strides = [1, 1, 1]} : vector<1x20x12xf32> to vector<1x12x12xf32>
    %273 = vector.broadcast %208 : f32 to vector<1x12x12xf32>
    %274 = arith.mulf %272, %273 : vector<1x12x12xf32>
    %275 = arith.addf %271, %274 : vector<1x12x12xf32>
    %276 = vector.extract_strided_slice %247 {offsets = [0, 7, 0], sizes = [1, 12, 12], strides = [1, 1, 1]} : vector<1x20x12xf32> to vector<1x12x12xf32>
    %277 = vector.broadcast %209 : f32 to vector<1x12x12xf32>
    %278 = arith.mulf %276, %277 : vector<1x12x12xf32>
    %279 = arith.addf %275, %278 : vector<1x12x12xf32>
    %280 = vector.extract_strided_slice %247 {offsets = [0, 8, 0], sizes = [1, 12, 12], strides = [1, 1, 1]} : vector<1x20x12xf32> to vector<1x12x12xf32>
    %281 = vector.broadcast %210 : f32 to vector<1x12x12xf32>
    %282 = arith.mulf %280, %281 : vector<1x12x12xf32>
    %283 = arith.addf %279, %282 : vector<1x12x12xf32>
    %c27 = arith.constant 27 : index
    %284 = memref.load %arg1[%c27] : memref<36xf32, #tpu.memory_space<smem>>
    %c28 = arith.constant 28 : index
    %285 = memref.load %arg1[%c28] : memref<36xf32, #tpu.memory_space<smem>>
    %c29 = arith.constant 29 : index
    %286 = memref.load %arg1[%c29] : memref<36xf32, #tpu.memory_space<smem>>
    %c30 = arith.constant 30 : index
    %287 = memref.load %arg1[%c30] : memref<36xf32, #tpu.memory_space<smem>>
    %c31 = arith.constant 31 : index
    %288 = memref.load %arg1[%c31] : memref<36xf32, #tpu.memory_space<smem>>
    %c32 = arith.constant 32 : index
    %289 = memref.load %arg1[%c32] : memref<36xf32, #tpu.memory_space<smem>>
    %c33 = arith.constant 33 : index
    %290 = memref.load %arg1[%c33] : memref<36xf32, #tpu.memory_space<smem>>
    %c34 = arith.constant 34 : index
    %291 = memref.load %arg1[%c34] : memref<36xf32, #tpu.memory_space<smem>>
    %c35 = arith.constant 35 : index
    %292 = memref.load %arg1[%c35] : memref<36xf32, #tpu.memory_space<smem>>
    %c27_67 = arith.constant 27 : index
    %293 = memref.load %arg2[%c27_67] : memref<36xf32, #tpu.memory_space<smem>>
    %c28_68 = arith.constant 28 : index
    %294 = memref.load %arg2[%c28_68] : memref<36xf32, #tpu.memory_space<smem>>
    %c29_69 = arith.constant 29 : index
    %295 = memref.load %arg2[%c29_69] : memref<36xf32, #tpu.memory_space<smem>>
    %c30_70 = arith.constant 30 : index
    %296 = memref.load %arg2[%c30_70] : memref<36xf32, #tpu.memory_space<smem>>
    %c31_71 = arith.constant 31 : index
    %297 = memref.load %arg2[%c31_71] : memref<36xf32, #tpu.memory_space<smem>>
    %c32_72 = arith.constant 32 : index
    %298 = memref.load %arg2[%c32_72] : memref<36xf32, #tpu.memory_space<smem>>
    %c33_73 = arith.constant 33 : index
    %299 = memref.load %arg2[%c33_73] : memref<36xf32, #tpu.memory_space<smem>>
    %c34_74 = arith.constant 34 : index
    %300 = memref.load %arg2[%c34_74] : memref<36xf32, #tpu.memory_space<smem>>
    %c35_75 = arith.constant 35 : index
    %301 = memref.load %arg2[%c35_75] : memref<36xf32, #tpu.memory_space<smem>>
    %c0_76 = arith.constant 0 : index
    %c3_77 = arith.constant 3 : index
    %c0_78 = arith.constant 0 : index
    %c0_79 = arith.constant 0 : index
    %302 = vector.load %arg5[%c0_76, %c3_77, %c0_78, %c0_79] : memref<1x4x20x20xf32, #tpu.memory_space<vmem>>, vector<1x1x20x20xf32>
    %303 = vector.shape_cast %302 : vector<1x1x20x20xf32> to vector<1x20x20xf32>
    %304 = vector.extract_strided_slice %303 {offsets = [0, 0, 0], sizes = [1, 20, 12], strides = [1, 1, 1]} : vector<1x20x20xf32> to vector<1x20x12xf32>
    %305 = vector.broadcast %284 : f32 to vector<1x20x12xf32>
    %306 = arith.mulf %304, %305 : vector<1x20x12xf32>
    %307 = vector.extract_strided_slice %303 {offsets = [0, 0, 1], sizes = [1, 20, 12], strides = [1, 1, 1]} : vector<1x20x20xf32> to vector<1x20x12xf32>
    %308 = vector.broadcast %285 : f32 to vector<1x20x12xf32>
    %309 = arith.mulf %307, %308 : vector<1x20x12xf32>
    %310 = arith.addf %306, %309 : vector<1x20x12xf32>
    %311 = vector.extract_strided_slice %303 {offsets = [0, 0, 2], sizes = [1, 20, 12], strides = [1, 1, 1]} : vector<1x20x20xf32> to vector<1x20x12xf32>
    %312 = vector.broadcast %286 : f32 to vector<1x20x12xf32>
    %313 = arith.mulf %311, %312 : vector<1x20x12xf32>
    %314 = arith.addf %310, %313 : vector<1x20x12xf32>
    %315 = vector.extract_strided_slice %303 {offsets = [0, 0, 3], sizes = [1, 20, 12], strides = [1, 1, 1]} : vector<1x20x20xf32> to vector<1x20x12xf32>
    %316 = vector.broadcast %287 : f32 to vector<1x20x12xf32>
    %317 = arith.mulf %315, %316 : vector<1x20x12xf32>
    %318 = arith.addf %314, %317 : vector<1x20x12xf32>
    %319 = vector.extract_strided_slice %303 {offsets = [0, 0, 4], sizes = [1, 20, 12], strides = [1, 1, 1]} : vector<1x20x20xf32> to vector<1x20x12xf32>
    %320 = vector.broadcast %288 : f32 to vector<1x20x12xf32>
    %321 = arith.mulf %319, %320 : vector<1x20x12xf32>
    %322 = arith.addf %318, %321 : vector<1x20x12xf32>
    %323 = vector.extract_strided_slice %303 {offsets = [0, 0, 5], sizes = [1, 20, 12], strides = [1, 1, 1]} : vector<1x20x20xf32> to vector<1x20x12xf32>
    %324 = vector.broadcast %289 : f32 to vector<1x20x12xf32>
    %325 = arith.mulf %323, %324 : vector<1x20x12xf32>
    %326 = arith.addf %322, %325 : vector<1x20x12xf32>
    %327 = vector.extract_strided_slice %303 {offsets = [0, 0, 6], sizes = [1, 20, 12], strides = [1, 1, 1]} : vector<1x20x20xf32> to vector<1x20x12xf32>
    %328 = vector.broadcast %290 : f32 to vector<1x20x12xf32>
    %329 = arith.mulf %327, %328 : vector<1x20x12xf32>
    %330 = arith.addf %326, %329 : vector<1x20x12xf32>
    %331 = vector.extract_strided_slice %303 {offsets = [0, 0, 7], sizes = [1, 20, 12], strides = [1, 1, 1]} : vector<1x20x20xf32> to vector<1x20x12xf32>
    %332 = vector.broadcast %291 : f32 to vector<1x20x12xf32>
    %333 = arith.mulf %331, %332 : vector<1x20x12xf32>
    %334 = arith.addf %330, %333 : vector<1x20x12xf32>
    %335 = vector.extract_strided_slice %303 {offsets = [0, 0, 8], sizes = [1, 20, 12], strides = [1, 1, 1]} : vector<1x20x20xf32> to vector<1x20x12xf32>
    %336 = vector.broadcast %292 : f32 to vector<1x20x12xf32>
    %337 = arith.mulf %335, %336 : vector<1x20x12xf32>
    %338 = arith.addf %334, %337 : vector<1x20x12xf32>
    %339 = vector.extract_strided_slice %338 {offsets = [0, 0, 0], sizes = [1, 12, 12], strides = [1, 1, 1]} : vector<1x20x12xf32> to vector<1x12x12xf32>
    %340 = vector.broadcast %293 : f32 to vector<1x12x12xf32>
    %341 = arith.mulf %339, %340 : vector<1x12x12xf32>
    %342 = arith.addf %283, %341 : vector<1x12x12xf32>
    %343 = vector.extract_strided_slice %338 {offsets = [0, 1, 0], sizes = [1, 12, 12], strides = [1, 1, 1]} : vector<1x20x12xf32> to vector<1x12x12xf32>
    %344 = vector.broadcast %294 : f32 to vector<1x12x12xf32>
    %345 = arith.mulf %343, %344 : vector<1x12x12xf32>
    %346 = arith.addf %342, %345 : vector<1x12x12xf32>
    %347 = vector.extract_strided_slice %338 {offsets = [0, 2, 0], sizes = [1, 12, 12], strides = [1, 1, 1]} : vector<1x20x12xf32> to vector<1x12x12xf32>
    %348 = vector.broadcast %295 : f32 to vector<1x12x12xf32>
    %349 = arith.mulf %347, %348 : vector<1x12x12xf32>
    %350 = arith.addf %346, %349 : vector<1x12x12xf32>
    %351 = vector.extract_strided_slice %338 {offsets = [0, 3, 0], sizes = [1, 12, 12], strides = [1, 1, 1]} : vector<1x20x12xf32> to vector<1x12x12xf32>
    %352 = vector.broadcast %296 : f32 to vector<1x12x12xf32>
    %353 = arith.mulf %351, %352 : vector<1x12x12xf32>
    %354 = arith.addf %350, %353 : vector<1x12x12xf32>
    %355 = vector.extract_strided_slice %338 {offsets = [0, 4, 0], sizes = [1, 12, 12], strides = [1, 1, 1]} : vector<1x20x12xf32> to vector<1x12x12xf32>
    %356 = vector.broadcast %297 : f32 to vector<1x12x12xf32>
    %357 = arith.mulf %355, %356 : vector<1x12x12xf32>
    %358 = arith.addf %354, %357 : vector<1x12x12xf32>
    %359 = vector.extract_strided_slice %338 {offsets = [0, 5, 0], sizes = [1, 12, 12], strides = [1, 1, 1]} : vector<1x20x12xf32> to vector<1x12x12xf32>
    %360 = vector.broadcast %298 : f32 to vector<1x12x12xf32>
    %361 = arith.mulf %359, %360 : vector<1x12x12xf32>
    %362 = arith.addf %358, %361 : vector<1x12x12xf32>
    %363 = vector.extract_strided_slice %338 {offsets = [0, 6, 0], sizes = [1, 12, 12], strides = [1, 1, 1]} : vector<1x20x12xf32> to vector<1x12x12xf32>
    %364 = vector.broadcast %299 : f32 to vector<1x12x12xf32>
    %365 = arith.mulf %363, %364 : vector<1x12x12xf32>
    %366 = arith.addf %362, %365 : vector<1x12x12xf32>
    %367 = vector.extract_strided_slice %338 {offsets = [0, 7, 0], sizes = [1, 12, 12], strides = [1, 1, 1]} : vector<1x20x12xf32> to vector<1x12x12xf32>
    %368 = vector.broadcast %300 : f32 to vector<1x12x12xf32>
    %369 = arith.mulf %367, %368 : vector<1x12x12xf32>
    %370 = arith.addf %366, %369 : vector<1x12x12xf32>
    %371 = vector.extract_strided_slice %338 {offsets = [0, 8, 0], sizes = [1, 12, 12], strides = [1, 1, 1]} : vector<1x20x12xf32> to vector<1x12x12xf32>
    %372 = vector.broadcast %301 : f32 to vector<1x12x12xf32>
    %373 = arith.mulf %371, %372 : vector<1x12x12xf32>
    %374 = arith.addf %370, %373 : vector<1x12x12xf32>
    %c0_80 = arith.constant 0 : index
    %c0_81 = arith.constant 0 : index
    %c0_82 = arith.constant 0 : index
    %c0_83 = arith.constant 0 : index
    %375 = vector.load %arg4[%c0_80, %c0_81, %c0_82, %c0_83] : memref<1x1x12x12xf32, #tpu.memory_space<vmem>>, vector<1x1x12x12xf32>
    %376 = vector.shape_cast %375 : vector<1x1x12x12xf32> to vector<1x12x12xf32>
    %377 = vector.shape_cast %374 : vector<1x12x12xf32> to vector<1x1x12x12xf32>
    tpu.vector_store %arg4[%c0_80, %c0_81, %c0_82, %c0_83], %377 {strides = array<i32>} : memref<1x1x12x12xf32, #tpu.memory_space<vmem>>, vector<1x1x12x12xf32>,
    return
  }
  func.func @transform_0(%arg0: i32) -> i32 {
    %c0_i32 = arith.constant 0 : i32
    %c0_i32_0 = arith.constant 0 : i32
    return %c0_i32 : i32
  }
  func.func @transform_1(%arg0: i32) -> i32 {
    %c0_i32 = arith.constant 0 : i32
    %c0_i32_0 = arith.constant 0 : i32
    return %c0_i32 : i32
  }
  func.func @transform_2(%arg0: i32) -> (i32, i32, i32, i32) {
    %c0_i32 = arith.constant 0 : i32
    %c0_i32_0 = arith.constant 0 : i32
    %c0_i32_1 = arith.constant 0 : i32
    %c0_i32_2 = arith.constant 0 : i32
    return %arg0, %c0_i32, %c0_i32_0, %c0_i32_1 : i32, i32, i32, i32
  }
  func.func @transform_3(%arg0: i32) -> (i32, i32, i32, i32) {
    %c0_i32 = arith.constant 0 : i32
    %c0_i32_0 = arith.constant 0 : i32
    %c0_i32_1 = arith.constant 0 : i32
    %c0_i32_2 = arith.constant 0 : i32
    return %arg0, %c0_i32, %c0_i32_0, %c0_i32_1 : i32, i32, i32, i32
  }
}

</mosaic_0001>

<llo_original>
// kernel: tpu_custom_call.1
$region0: #{tpu_custom_call.1}
  #allocation0 [shape = 'u32[]', space=smem, size = 0x4, offset = 0x4, fixed_abs, tag = 'smem constant byte address 0x4 - core index']
  #allocation1 [shape = 'u32[144,128]{1,0:T(1,128)}', space=vmem, size = 0x12000, scoped, tag = 'internal scratch']
  #allocation2 [shape = 'f32[1,4,20,20]{3,2,1,0:T(8,128)}', space=vmem, size = 0xc000, scoped, tag = 'scratch operand']
  %s0 = inlined_call_operand.hbm [shape: f32[36], index: 0, kind: input, shape index: {}]
  %s1 = inlined_call_operand.vmem [shape: f32[36], index: 1, kind: input, shape index: {}]
  %s2 = inlined_call_operand.hbm [shape: f32[2,4,16,16], index: 2, kind: input, shape index: {}]
  %s3 = inlined_call_operand.vmem [shape: f32[2,1,12,12], index: 3, kind: output, shape index: {}]
  %s4 = sld [smem:[#allocation0]]
  $region57: #{tpu_custom_call.1} parent=0
    _
  %s6 = ssub.s32 1, %s4
  %s7 = scalar_select 0, %s6, %s4
  $region1: #{tpu_custom_call.1} parent=0
    #allocation3 [shape = 'u8[512]{0}', space=smem, size = 0x200, scoped, tag = 'input window, operand 0, single buffered']
    #allocation4 [shape = 's32[2]{0}', space=sflag, size = 0x8, scoped, tag = 'scoped memory for tpu_custom_call.1']
    #allocation5 [shape = 's32[2]{0}', space=sflag, size = 0x8, scoped, tag = 'scoped memory for tpu_custom_call.1']
    #allocation6 [shape = 's32[2]{0}', space=sflag, size = 0x8, scoped, tag = 'scoped memory for tpu_custom_call.1']
    #allocation7 [shape = 'u8[512]{0}', space=smem, size = 0x200, scoped, tag = 'input window, operand 1, single buffered']
    #allocation8 [shape = 'u8[65536]{0}', space=vmem, size = 0x10000, scoped, tag = 'input window, operand 2']
    %8 = vsyncpa [#allocation5], 0
    %9 = vsyncpa [#allocation6], 0
    %10 = vsyncpa [#allocation4], 0
    %s11 = scalar_lea.sflag [#allocation4], 1
    %12 = vsyncpa %s11, 0
    loop: start=0, step=1, limit=4
    $region2: #{tpu_custom_call.1} parent=1 // loop_pre_header
      _
    $region3: #{tpu_custom_call.1} parent=1 // loop_header
      %s14 = sphi 0, %s18
      %p15 = scmp.ge.s32.totalorder %s14, 4
      %s22 = sphi 0, %s22
      %s24 = sphi 0, %s22
      %s25 = sphi 0, %s24
      %s39 = sphi 0, %s25
      %s43 = sphi 0, %s43
      %s45 = sphi 0, %s43
      %s46 = sphi 0, %s45
      %s60 = sphi 0, %s46
      %s66 = sphi 0, %s68
      %s69 = sphi 0, %s66
      %s70 = sphi 0, %s69
      %s86 = sphi 0, %s70
      %s92 = sphi 0, %s94
      %s95 = sphi 0, %s92
      %s96 = sphi 0, %s95
      %s112 = sphi 0, %s96
    $region4: #{tpu_custom_call.1} parent=1 // loop_header_branch
      %17 = sbr.rel (%p15) target = $region8
    $region5: #{tpu_custom_call.1} parent=1 // loop_body
      %s19 = ssub.s32 %s14, 1
      %s20 = ssub.s32 %s14, 2
      %s21 = sadd.s32 %s14, 1
      %s23 = sadd.s32 %s22, 1
      %p26 = scmp.eq.s32.totalorder %s14, 1
      %p27 = scmp.ne.s32.totalorder %s22, %s24
      %p28 = scmp.eq.s32.totalorder %s14, 0
      %p29 = por %p27, %p28
      %p30 = scmp.ne.s32.totalorder %s22, %s24
      %p31 = scmp.eq.s32.totalorder %s19, 1
      %p32 = por %p30, %p31
      %p33 = scmp.ne.s32.totalorder %s24, %s25
      %p34 = scmp.eq.s32.totalorder %s19, 0
      %p35 = por %p33, %p34
      %p36 = scmp.ne.s32.totalorder %s24, %s25
      %p37 = scmp.eq.s32.totalorder %s20, 1
      %p38 = por %p36, %p37
      %p40 = scmp.ne.s32.totalorder %s25, %s39
      %p41 = scmp.eq.s32.totalorder %s20, 0
      %p42 = por %p40, %p41
      %s44 = sadd.s32 %s43, 1
      %p47 = scmp.eq.s32.totalorder %s14, 1
      %p48 = scmp.ne.s32.totalorder %s43, %s45
      %p49 = scmp.eq.s32.totalorder %s14, 0
      %p50 = por %p48, %p49
      %p51 = scmp.ne.s32.totalorder %s43, %s45
      %p52 = scmp.eq.s32.totalorder %s19, 1
      %p53 = por %p51, %p52
      %p54 = scmp.ne.s32.totalorder %s45, %s46
      %p55 = scmp.eq.s32.totalorder %s19, 0
      %p56 = por %p54, %p55
      %p57 = scmp.ne.s32.totalorder %s45, %s46
      %p58 = scmp.eq.s32.totalorder %s20, 1
      %p59 = por %p57, %p58
      %p61 = scmp.ne.s32.totalorder %s46, %s60
      %p62 = scmp.eq.s32.totalorder %s20, 0
      %p63 = por %p61, %p62
      %s64 = ssub.s32 %s14, %s21
      %p65 = scmp.eq.s32.totalorder %s64, 0
      %s67 = sadd.s32 %s66, 1
      %s68 = scalar_select %p65, %s66, %s67
      %p71 = pneg %p65
      %p72 = scmp.eq.s32.totalorder %s14, 1
      %p73 = por %p71, %p72
      %p74 = scmp.ne.s32.totalorder %s66, %s69
      %p75 = scmp.eq.s32.totalorder %s14, 0
      %p76 = por %p74, %p75
      %p77 = scmp.ne.s32.totalorder %s66, %s69
      %p78 = scmp.eq.s32.totalorder %s19, 1
      %p79 = por %p77, %p78
      %p80 = scmp.ne.s32.totalorder %s69, %s70
      %p81 = scmp.eq.s32.totalorder %s19, 0
      %p82 = por %p80, %p81
      %p83 = scmp.ne.s32.totalorder %s69, %s70
      %p84 = scmp.eq.s32.totalorder %s20, 1
      %p85 = por %p83, %p84
      %p87 = scmp.ne.s32.totalorder %s70, %s86
      %p88 = scmp.eq.s32.totalorder %s20, 0
      %p89 = por %p87, %p88
      %s90 = ssub.s32 %s14, %s21
      %p91 = scmp.eq.s32.totalorder %s90, 0
      %s93 = sadd.s32 %s92, 1
      %s94 = scalar_select %p91, %s92, %s93
      %p97 = pneg %p91
      %p98 = scmp.eq.s32.totalorder %s14, 1
      %p99 = por %p97, %p98
      %p100 = scmp.ne.s32.totalorder %s92, %s95
      %p101 = scmp.eq.s32.totalorder %s14, 0
      %p102 = por %p100, %p101
      %p103 = scmp.ne.s32.totalorder %s92, %s95
      %p104 = scmp.eq.s32.totalorder %s19, 1
      %p105 = por %p103, %p104
      %p106 = scmp.ne.s32.totalorder %s95, %s96
      %p107 = scmp.eq.s32.totalorder %s19, 0
      %p108 = por %p106, %p107
      %p109 = scmp.ne.s32.totalorder %s95, %s96
      %p110 = scmp.eq.s32.totalorder %s20, 1
      %p111 = por %p109, %p110
      %p113 = scmp.ne.s32.totalorder %s96, %s112
      %p114 = scmp.eq.s32.totalorder %s20, 0
      %p115 = por %p113, %p114
      %p116 = scmp.le.s32.totalorder 1, %s14
      %p117 = scmp.lt.s32.totalorder %s14, 3
      %p118 = pnand %p116, %p117
      %p119 = pneg %p118
      // Predicated region
      $region9: #{tpu_custom_call.1} parent=5 // pred_check
        _
      $region10: #{tpu_custom_call.1} parent=5 // pred_check_branch
        %121 = sbr.rel (%p118) target = $region12
      $region11: #{tpu_custom_call.1} parent=5 // pred_region
        %s122 = ssub.s32 %s14, 1
        // Predicated region
        $region13: #{tpu_custom_call.1} parent=11 // pred_check
          %p123 = pneg %p35
        $region14: #{tpu_custom_call.1} parent=11 // pred_check_branch
          %125 = sbr.rel (%p123) target = $region16
        $region15: #{tpu_custom_call.1} parent=11 // pred_region
          %s127 = ssub.s32 16, 16
          %128 = vsyncadd [#allocation5], %s127
          %131 = dma.hbm_to_smem %s0, 16, [#allocation3], [#allocation5]
        $region16: #{tpu_custom_call.1} parent=11 // pred_fallthru
          _
        // Predicated region
        $region17: #{tpu_custom_call.1} parent=11 // pred_check
          %p132 = pneg %p56
        $region18: #{tpu_custom_call.1} parent=11 // pred_check_branch
          %134 = sbr.rel (%p132) target = $region20
        $region19: #{tpu_custom_call.1} parent=11 // pred_region
          %s136 = ssub.s32 16, 16
          %137 = vsyncadd [#allocation6], %s136
          %s139 = sshll.u32 %s1, 4
          %s140 = int_to_ptr.vmem [resolvable:$true] %s139
          %142 = dma.vmem_to_smem %s140, 16, [#allocation7], [#allocation6]
        $region20: #{tpu_custom_call.1} parent=11 // pred_fallthru
          _
      $region12: #{tpu_custom_call.1} parent=5 // pred_fallthru
        _
      %p143 = scmp.lt.s32.totalorder %s14, 2
      // Predicated region
      $region21: #{tpu_custom_call.1} parent=5 // pred_check
        %p144 = pneg %p143
      $region22: #{tpu_custom_call.1} parent=5 // pred_check_branch
        %146 = sbr.rel (%p144) target = $region24
      $region23: #{tpu_custom_call.1} parent=5 // pred_region
        // Predicated region
        $region25: #{tpu_custom_call.1} parent=23 // pred_check
          %p147 = pneg %p76
        $region26: #{tpu_custom_call.1} parent=23 // pred_check_branch
          %149 = sbr.rel (%p147) target = $region28
        $region27: #{tpu_custom_call.1} parent=23 // pred_region
          %s150 = sand.u32 %s66, 1
          %s151 = scalar_lea.sflag [#allocation4], %s150
          %s152 = sand.u32 %s66, 1
          %s153 = smul.addr %s152, 64
          %s154 = scalar_lea.vmem [#allocation8], %s153
          %s156 = ssub.s32 1024, 1024
          %157 = vsyncadd %s151, %s156
          %s158 = smul.addr %s14, 8
          %s159 = smul.addr %s158, 128
          %s160 = scalar_lea.hbm %s2, %s159
          %s161 = sshll.u32 %s154, 4
          %s162 = int_to_ptr.vmem [resolvable:$true] %s161
          %167 = dma.hbm_to_vmem [thread:$0]  %s160, 1024, %s162, %s151, 128, 128, 8
        $region28: #{tpu_custom_call.1} parent=23 // pred_fallthru
          _
      $region24: #{tpu_custom_call.1} parent=5 // pred_fallthru
        _
      %p168 = scmp.le.s32.totalorder 1, %s14
      %p169 = scmp.lt.s32.totalorder %s14, 3
      %p170 = pnand %p168, %p169
      %p171 = pneg %p170
      // Predicated region
      $region29: #{tpu_custom_call.1} parent=5 // pred_check
        _
      $region30: #{tpu_custom_call.1} parent=5 // pred_check_branch
        %173 = sbr.rel (%p170) target = $region32
      $region31: #{tpu_custom_call.1} parent=5 // pred_region
        %s174 = ssub.s32 %s14, 1
        // Predicated region
        $region33: #{tpu_custom_call.1} parent=31 // pred_check
          %p175 = pneg %p35
        $region34: #{tpu_custom_call.1} parent=31 // pred_check_branch
          %177 = sbr.rel (%p175) target = $region36
        $region35: #{tpu_custom_call.1} parent=31 // pred_region
          %178 = dma.done [#allocation5], 16
        $region36: #{tpu_custom_call.1} parent=31 // pred_fallthru
          _
        // Predicated region
        $region37: #{tpu_custom_call.1} parent=31 // pred_check
          %p179 = pneg %p56
        $region38: #{tpu_custom_call.1} parent=31 // pred_check_branch
          %181 = sbr.rel (%p179) target = $region40
        $region39: #{tpu_custom_call.1} parent=31 // pred_region
          %182 = dma.done [#allocation6], 16
        $region40: #{tpu_custom_call.1} parent=31 // pred_fallthru
          _
        %s183 = sand.u32 %s69, 1
        %s184 = scalar_lea.sflag [#allocation4], %s183
        %s185 = sand.u32 %s69, 1
        %s186 = smul.addr %s185, 64
        %s187 = scalar_lea.vmem [#allocation8], %s186
        // Predicated region
        $region41: #{tpu_custom_call.1} parent=31 // pred_check
          %p188 = pneg %p82
        $region42: #{tpu_custom_call.1} parent=31 // pred_check_branch
          %190 = sbr.rel (%p188) target = $region44
        $region43: #{tpu_custom_call.1} parent=31 // pred_region
          %191 = dma.done %s184, 1024
        $region44: #{tpu_custom_call.1} parent=31 // pred_fallthru
          _
        %192 = sfence
        %p193 = pneg %p35
        %p194 = pneg %p32
        %p195 = pneg %p56
        %p196 = pneg %p53
        %s197 = sand.u32 %s69, 1
        %s198 = scalar_lea.sflag [#allocation4], %s197
        %s199 = sand.u32 %s69, 1
        %s200 = smul.addr %s199, 64
        %s201 = scalar_lea.vmem [#allocation8], %s200
        %p202 = pneg %p82
        %p203 = pneg %p79
        %p204 = pneg %p108
        %p205 = pneg %p105
        %p206 = scmp.lt.s32.totalorder %s19, 1
        %s207 = scalar_select %p206, %s19, 1
        %s208 = smul.addr %s207, 2
        %s209 = smul.addr %s208, 8
        %s210 = scalar_lea.vmem %s3, %s209
        %p211 = scmp.lt.s32.totalorder %s19, 1
        %s212 = scalar_select %p211, %s19, 1
        %s213 = smul.addr %s212, 2
        %s214 = smul.addr %s213, 8
        %s215 = scalar_lea.vmem %s3, %s214
        %vm216 = vcmask 156672
        %217 = vst.msk [vmem:[#allocation2] sm:$0x3] %vm216, 0.0
        %218 = vst.msk [vmem:[#allocation2 + $0x18] sm:$0x3] %vm216, 0.0
        %219 = vst.msk [vmem:[#allocation2 + $0x30] sm:$0x3] %vm216, 0.0
        %220 = vst.msk [vmem:[#allocation2 + $0x48] sm:$0x3] %vm216, 0.0
        %221 = vst.msk [vmem:[#allocation2 + $0x12] sm:$0x3] %vm216, 0.0
        %222 = vst.msk [vmem:[#allocation2 + $0x2a] sm:$0x3] %vm216, 0.0
        %223 = vst.msk [vmem:[#allocation2 + $0x42] sm:$0x3] %vm216, 0.0
        %224 = vst.msk [vmem:[#allocation2 + $0x5a] sm:$0x3] %vm216, 0.0
        %vm225 = vcmask 15360
        %226 = vst.msk [vmem:[#allocation2] sm:$0xff] %vm225, 0.0
        %227 = vst.msk [vmem:[#allocation2 + $0x8] sm:$0xff] %vm225, 0.0
        %vm228 = vcmask 11264
        %229 = vst.msk [vmem:[#allocation2 + $0x10] sm:$0xf] %vm228, 0.0
        %230 = vst.msk [vmem:[#allocation2 + $0x18] sm:$0xff] %vm225, 0.0
        %231 = vst.msk [vmem:[#allocation2 + $0x20] sm:$0xff] %vm225, 0.0
        %232 = vst.msk [vmem:[#allocation2 + $0x28] sm:$0xf] %vm228, 0.0
        %233 = vst.msk [vmem:[#allocation2 + $0x30] sm:$0xff] %vm225, 0.0
        %234 = vst.msk [vmem:[#allocation2 + $0x38] sm:$0xff] %vm225, 0.0
        %235 = vst.msk [vmem:[#allocation2 + $0x40] sm:$0xf] %vm228, 0.0
        %236 = vst.msk [vmem:[#allocation2 + $0x48] sm:$0xff] %vm225, 0.0
        %237 = vst.msk [vmem:[#allocation2 + $0x50] sm:$0xff] %vm225, 0.0
        %238 = vst.msk [vmem:[#allocation2 + $0x58] sm:$0xf] %vm228, 0.0
        %vm239 = vcmask 162960
        %240 = vst.msk [vmem:[#allocation2] sm:$0xff] %vm239, 0.0
        %241 = vst.msk [vmem:[#allocation2 + $0x8] sm:$0xff] %vm239, 0.0
        %vm242 = vcmask 158864
        %243 = vst.msk [vmem:[#allocation2 + $0x10] sm:$0xf] %vm242, 0.0
        %244 = vst.msk [vmem:[#allocation2 + $0x18] sm:$0xff] %vm239, 0.0
        %245 = vst.msk [vmem:[#allocation2 + $0x20] sm:$0xff] %vm239, 0.0
        %246 = vst.msk [vmem:[#allocation2 + $0x28] sm:$0xf] %vm242, 0.0
        %247 = vst.msk [vmem:[#allocation2 + $0x30] sm:$0xff] %vm239, 0.0
        %248 = vst.msk [vmem:[#allocation2 + $0x38] sm:$0xff] %vm239, 0.0
        %249 = vst.msk [vmem:[#allocation2 + $0x40] sm:$0xf] %vm242, 0.0
        %250 = vst.msk [vmem:[#allocation2 + $0x48] sm:$0xff] %vm239, 0.0
        %251 = vst.msk [vmem:[#allocation2 + $0x50] sm:$0xff] %vm239, 0.0
        %252 = vst.msk [vmem:[#allocation2 + $0x58] sm:$0xf] %vm242, 0.0
        %v253 = vld [vmem:[%s187] sm:$0xff]
        %v254 = vld [vmem:[%s187 + $0x8] sm:$0xff]
        %v255 = vld [vmem:[%s187 + $0x10] sm:$0xff]
        %v256 = vld [vmem:[%s187 + $0x18] sm:$0xff]
        %v257 = vld [vmem:[%s187 + $0x20] sm:$0xff]
        %v258 = vld [vmem:[%s187 + $0x28] sm:$0xff]
        %v259 = vld [vmem:[%s187 + $0x30] sm:$0xff]
        %v260 = vld [vmem:[%s187 + $0x38] sm:$0xff]
        %269 = vrot.lane.b32.xlu0 %v253, 2
        %v270 = vpop.permute.xlu0 %269
        %271 = vrot.lane.b32.xlu0 %v254, 2
        %v272 = vpop.permute.xlu0 %271
        %273 = vrot.lane.b32.xlu0 %v255, 2
        %v274 = vpop.permute.xlu0 %273
        %275 = vrot.lane.b32.xlu0 %v256, 2
        %v276 = vpop.permute.xlu0 %275
        %277 = vrot.lane.b32.xlu0 %v257, 2
        %v278 = vpop.permute.xlu0 %277
        %279 = vrot.lane.b32.xlu0 %v258, 2
        %v280 = vpop.permute.xlu0 %279
        %281 = vrot.lane.b32.xlu0 %v259, 2
        %v282 = vpop.permute.xlu0 %281
        %283 = vrot.lane.b32.xlu0 %v260, 2
        %v284 = vpop.permute.xlu0 %283
        %vm293 = vcmask 146448
        %294 = vst.msk [vmem:[#allocation2 + $0x2] sm:$0xff] %vm293, %v270
        %295 = vst.msk [vmem:[#allocation2 + $0xa] sm:$0xff] %vm293, %v272
        %296 = vst.msk [vmem:[#allocation2 + $0x1a] sm:$0xff] %vm293, %v274
        %297 = vst.msk [vmem:[#allocation2 + $0x22] sm:$0xff] %vm293, %v276
        %298 = vst.msk [vmem:[#allocation2 + $0x32] sm:$0xff] %vm293, %v278
        %299 = vst.msk [vmem:[#allocation2 + $0x3a] sm:$0xff] %vm293, %v280
        %300 = vst.msk [vmem:[#allocation2 + $0x4a] sm:$0xff] %vm293, %v282
        %301 = vst.msk [vmem:[#allocation2 + $0x52] sm:$0xff] %vm293, %v284
        %s302 = sld [smem:[#allocation3]]
        %s303 = sld [smem:[#allocation3 + $0x1]]
        %s304 = sld [smem:[#allocation3 + $0x2]]
        %s305 = sld [smem:[#allocation3 + $0x3]]
        %s306 = sld [smem:[#allocation3 + $0x4]]
        %s307 = sld [smem:[#allocation3 + $0x5]]
        %s308 = sld [smem:[#allocation3 + $0x6]]
        %s309 = sld [smem:[#allocation3 + $0x7]]
        %s310 = sld [smem:[#allocation3 + $0x8]]
        %s311 = sld [smem:[#allocation7]]
        %s312 = sld [smem:[#allocation7 + $0x1]]
        %s313 = sld [smem:[#allocation7 + $0x2]]
        %s314 = sld [smem:[#allocation7 + $0x3]]
        %s315 = sld [smem:[#allocation7 + $0x4]]
        %s316 = sld [smem:[#allocation7 + $0x5]]
        %s317 = sld [smem:[#allocation7 + $0x6]]
        %s318 = sld [smem:[#allocation7 + $0x7]]
        %s319 = sld [smem:[#allocation7 + $0x8]]
        %v320 = vld [vmem:[#allocation2] sm:$0xff]
        %v321 = vld [vmem:[#allocation2 + $0x8] sm:$0xff]
        %v322 = vld [vmem:[#allocation2 + $0x10] sm:$0xf]
        %v323 = vstv %s302
        %v324 = vmul.f32 %v320, %v323
        %v325 = vmul.f32 %v321, %v323
        %v326 = vmul.f32 %v322, %v323
        %v327 = vstv %s303
        %v328 = vmul.f32 %v320, %v327
        %v329 = vmul.f32 %v321, %v327
        %v330 = vmul.f32 %v322, %v327
        %334 = vrot.lane.b32.xlu0 %v328, 127
        %v335 = vpop.permute.xlu0 %334
        %336 = vrot.lane.b32.xlu0 %v329, 127
        %v337 = vpop.permute.xlu0 %336
        %338 = vrot.lane.b32.xlu0 %v330, 127
        %v339 = vpop.permute.xlu0 %338
        %v343 = vadd.f32 %v324, %v335
        %v344 = vadd.f32 %v325, %v337
        %v345 = vadd.f32 %v326, %v339
        %v346 = vstv %s304
        %v347 = vmul.f32 %v320, %v346
        %v348 = vmul.f32 %v321, %v346
        %v349 = vmul.f32 %v322, %v346
        %353 = vrot.lane.b32.xlu0 %v347, 126
        %v354 = vpop.permute.xlu0 %353
        %355 = vrot.lane.b32.xlu0 %v348, 126
        %v356 = vpop.permute.xlu0 %355
        %357 = vrot.lane.b32.xlu0 %v349, 126
        %v358 = vpop.permute.xlu0 %357
        %v362 = vadd.f32 %v343, %v354
        %v363 = vadd.f32 %v344, %v356
        %v364 = vadd.f32 %v345, %v358
        %v365 = vstv %s305
        %v366 = vmul.f32 %v320, %v365
        %v367 = vmul.f32 %v321, %v365
        %v368 = vmul.f32 %v322, %v365
        %372 = vrot.lane.b32.xlu0 %v366, 125
        %v373 = vpop.permute.xlu0 %372
        %374 = vrot.lane.b32.xlu0 %v367, 125
        %v375 = vpop.permute.xlu0 %374
        %376 = vrot.lane.b32.xlu0 %v368, 125
        %v377 = vpop.permute.xlu0 %376
        %v381 = vadd.f32 %v362, %v373
        %v382 = vadd.f32 %v363, %v375
        %v383 = vadd.f32 %v364, %v377
        %v384 = vstv %s306
        %v385 = vmul.f32 %v320, %v384
        %v386 = vmul.f32 %v321, %v384
        %v387 = vmul.f32 %v322, %v384
        %391 = vrot.lane.b32.xlu0 %v385, 124
        %v392 = vpop.permute.xlu0 %391
        %393 = vrot.lane.b32.xlu0 %v386, 124
        %v394 = vpop.permute.xlu0 %393
        %395 = vrot.lane.b32.xlu0 %v387, 124
        %v396 = vpop.permute.xlu0 %395
        %v400 = vadd.f32 %v381, %v392
        %v401 = vadd.f32 %v382, %v394
        %v402 = vadd.f32 %v383, %v396
        %v403 = vstv %s307
        %v404 = vmul.f32 %v320, %v403
        %v405 = vmul.f32 %v321, %v403
        %v406 = vmul.f32 %v322, %v403
        %410 = vrot.lane.b32.xlu0 %v404, 123
        %v411 = vpop.permute.xlu0 %410
        %412 = vrot.lane.b32.xlu0 %v405, 123
        %v413 = vpop.permute.xlu0 %412
        %414 = vrot.lane.b32.xlu0 %v406, 123
        %v415 = vpop.permute.xlu0 %414
        %v419 = vadd.f32 %v400, %v411
        %v420 = vadd.f32 %v401, %v413
        %v421 = vadd.f32 %v402, %v415
        %v422 = vstv %s308
        %v423 = vmul.f32 %v320, %v422
        %v424 = vmul.f32 %v321, %v422
        %v425 = vmul.f32 %v322, %v422
        %429 = vrot.lane.b32.xlu0 %v423, 122
        %v430 = vpop.permute.xlu0 %429
        %431 = vrot.lane.b32.xlu0 %v424, 122
        %v432 = vpop.permute.xlu0 %431
        %433 = vrot.lane.b32.xlu0 %v425, 122
        %v434 = vpop.permute.xlu0 %433
        %v438 = vadd.f32 %v419, %v430
        %v439 = vadd.f32 %v420, %v432
        %v440 = vadd.f32 %v421, %v434
        %v441 = vstv %s309
        %v442 = vmul.f32 %v320, %v441
        %v443 = vmul.f32 %v321, %v441
        %v444 = vmul.f32 %v322, %v441
        %448 = vrot.lane.b32.xlu0 %v442, 121
        %v449 = vpop.permute.xlu0 %448
        %450 = vrot.lane.b32.xlu0 %v443, 121
        %v451 = vpop.permute.xlu0 %450
        %452 = vrot.lane.b32.xlu0 %v444, 121
        %v453 = vpop.permute.xlu0 %452
        %v457 = vadd.f32 %v438, %v449
        %v458 = vadd.f32 %v439, %v451
        %v459 = vadd.f32 %v440, %v453
        %v460 = vstv %s310
        %v461 = vmul.f32 %v320, %v460
        %v462 = vmul.f32 %v321, %v460
        %v463 = vmul.f32 %v322, %v460
        %467 = vrot.lane.b32.xlu0 %v461, 120
        %v468 = vpop.permute.xlu0 %467
        %469 = vrot.lane.b32.xlu0 %v462, 120
        %v470 = vpop.permute.xlu0 %469
        %471 = vrot.lane.b32.xlu0 %v463, 120
        %v472 = vpop.permute.xlu0 %471
        %v476 = vadd.f32 %v457, %v468
        %v477 = vadd.f32 %v458, %v470
        %v478 = vadd.f32 %v459, %v472
        %v479 = vstv %s311
        %v480 = vmul.f32 %v476, %v479
        %v481 = vmul.f32 %v477, %v479
        %v482 = vadd.f32 %v480, 0.0
        %v483 = vadd.f32 %v481, 0.0
        %v484 = vstv %s312
        %v485 = vmul.f32 %v476, %v484
        %v486 = vmul.f32 %v477, %v484
        %vm489 = vcmask 1046528
        %v490 = vrot.slane %v485, 1
        %v491 = vrot.slane %v486, 1
        %v492 = vsel %vm489, %v490, %v491
        %v495 = vadd.f32 %v482, %v492
        %v496 = vadd.f32 %v483, %v491
        %v497 = vstv %s313
        %v498 = vmul.f32 %v476, %v497
        %v499 = vmul.f32 %v477, %v497
        %vm502 = vcmask 1045504
        %v503 = vrot.slane %v498, 2
        %v504 = vrot.slane %v499, 2
        %v505 = vsel %vm502, %v503, %v504
        %v508 = vadd.f32 %v495, %v505
        %v509 = vadd.f32 %v496, %v504
        %v510 = vstv %s314
        %v511 = vmul.f32 %v476, %v510
        %v512 = vmul.f32 %v477, %v510
        %vm515 = vcmask 1044480
        %v516 = vrot.slane %v511, 3
        %v517 = vrot.slane %v512, 3
        %v518 = vsel %vm515, %v516, %v517
        %v521 = vadd.f32 %v508, %v518
        %v522 = vadd.f32 %v509, %v517
        %v523 = vstv %s315
        %v524 = vmul.f32 %v476, %v523
        %v525 = vmul.f32 %v477, %v523
        %vm528 = vcmask 1043456
        %v529 = vrot.slane %v524, 4
        %v530 = vrot.slane %v525, 4
        %v531 = vsel %vm528, %v529, %v530
        %v534 = vadd.f32 %v521, %v531
        %v535 = vadd.f32 %v522, %v530
        %v536 = vstv %s316
        %v537 = vmul.f32 %v476, %v536
        %v538 = vmul.f32 %v477, %v536
        %v539 = vmul.f32 %v478, %v536
        %vm543 = vcmask 1042432
        %v544 = vrot.slane %v537, 5
        %v545 = vrot.slane %v538, 5
        %v546 = vsel %vm543, %v544, %v545
        %v547 = vrot.slane %v539, 5
        %v548 = vsel %vm543, %v545, %v547
        %v551 = vadd.f32 %v534, %v546
        %v552 = vadd.f32 %v535, %v548
        %v553 = vstv %s317
        %v554 = vmul.f32 %v476, %v553
        %v555 = vmul.f32 %v477, %v553
        %v556 = vmul.f32 %v478, %v553
        %vm560 = vcmask 1041408
        %v561 = vrot.slane %v554, 6
        %v562 = vrot.slane %v555, 6
        %v563 = vsel %vm560, %v561, %v562
        %v564 = vrot.slane %v556, 6
        %v565 = vsel %vm560, %v562, %v564
        %v568 = vadd.f32 %v551, %v563
        %v569 = vadd.f32 %v552, %v565
        %v570 = vstv %s318
        %v571 = vmul.f32 %v476, %v570
        %v572 = vmul.f32 %v477, %v570
        %v573 = vmul.f32 %v478, %v570
        %vm577 = vcmask 1040384
        %v578 = vrot.slane %v571, 7
        %v579 = vrot.slane %v572, 7
        %v580 = vsel %vm577, %v578, %v579
        %v581 = vrot.slane %v573, 7
        %v582 = vsel %vm577, %v579, %v581
        %v585 = vadd.f32 %v568, %v580
        %v586 = vadd.f32 %v569, %v582
        %v587 = vstv %s319
        %v588 = vmul.f32 %v477, %v587
        %v589 = vmul.f32 %v478, %v587
        %v590 = vadd.f32 %v585, %v588
        %v591 = vadd.f32 %v586, %v589
        %s592 = sld [smem:[#allocation3 + $0x9]]
        %s593 = sld [smem:[#allocation3 + $0xa]]
        %s594 = sld [smem:[#allocation3 + $0xb]]
        %s595 = sld [smem:[#allocation3 + $0xc]]
        %s596 = sld [smem:[#allocation3 + $0xd]]
        %s597 = sld [smem:[#allocation3 + $0xe]]
        %s598 = sld [smem:[#allocation3 + $0xf]]
        %s599 = sld [smem:[#allocation3 + $0x10]]
        %s600 = sld [smem:[#allocation3 + $0x11]]
        %s601 = sld [smem:[#allocation7 + $0x9]]
        %s602 = sld [smem:[#allocation7 + $0xa]]
        %s603 = sld [smem:[#allocation7 + $0xb]]
        %s604 = sld [smem:[#allocation7 + $0xc]]
        %s605 = sld [smem:[#allocation7 + $0xd]]
        %s606 = sld [smem:[#allocation7 + $0xe]]
        %s607 = sld [smem:[#allocation7 + $0xf]]
        %s608 = sld [smem:[#allocation7 + $0x10]]
        %s609 = sld [smem:[#allocation7 + $0x11]]
        %s610 = scalar_lea.vmem [#allocation2], 24
        %v611 = vld [vmem:[%s610] sm:$0xff]
        %v612 = vld [vmem:[%s610 + $0x8] sm:$0xff]
        %v613 = vld [vmem:[%s610 + $0x10] sm:$0xf]
        %v614 = vstv %s592
        %v615 = vmul.f32 %v611, %v614
        %v616 = vmul.f32 %v612, %v614
        %v617 = vmul.f32 %v613, %v614
        %v618 = vstv %s593
        %v619 = vmul.f32 %v611, %v618
        %v620 = vmul.f32 %v612, %v618
        %v621 = vmul.f32 %v613, %v618
        %625 = vrot.lane.b32.xlu0 %v619, 127
        %v626 = vpop.permute.xlu0 %625
        %627 = vrot.lane.b32.xlu0 %v620, 127
        %v628 = vpop.permute.xlu0 %627
        %629 = vrot.lane.b32.xlu0 %v621, 127
        %v630 = vpop.permute.xlu0 %629
        %v634 = vadd.f32 %v615, %v626
        %v635 = vadd.f32 %v616, %v628
        %v636 = vadd.f32 %v617, %v630
        %v637 = vstv %s594
        %v638 = vmul.f32 %v611, %v637
        %v639 = vmul.f32 %v612, %v637
        %v640 = vmul.f32 %v613, %v637
        %644 = vrot.lane.b32.xlu0 %v638, 126
        %v645 = vpop.permute.xlu0 %644
        %646 = vrot.lane.b32.xlu0 %v639, 126
        %v647 = vpop.permute.xlu0 %646
        %648 = vrot.lane.b32.xlu0 %v640, 126
        %v649 = vpop.permute.xlu0 %648
        %v653 = vadd.f32 %v634, %v645
        %v654 = vadd.f32 %v635, %v647
        %v655 = vadd.f32 %v636, %v649
        %v656 = vstv %s595
        %v657 = vmul.f32 %v611, %v656
        %v658 = vmul.f32 %v612, %v656
        %v659 = vmul.f32 %v613, %v656
        %663 = vrot.lane.b32.xlu0 %v657, 125
        %v664 = vpop.permute.xlu0 %663
        %665 = vrot.lane.b32.xlu0 %v658, 125
        %v666 = vpop.permute.xlu0 %665
        %667 = vrot.lane.b32.xlu0 %v659, 125
        %v668 = vpop.permute.xlu0 %667
        %v672 = vadd.f32 %v653, %v664
        %v673 = vadd.f32 %v654, %v666
        %v674 = vadd.f32 %v655, %v668
        %v675 = vstv %s596
        %v676 = vmul.f32 %v611, %v675
        %v677 = vmul.f32 %v612, %v675
        %v678 = vmul.f32 %v613, %v675
        %682 = vrot.lane.b32.xlu0 %v676, 124
        %v683 = vpop.permute.xlu0 %682
        %684 = vrot.lane.b32.xlu0 %v677, 124
        %v685 = vpop.permute.xlu0 %684
        %686 = vrot.lane.b32.xlu0 %v678, 124
        %v687 = vpop.permute.xlu0 %686
        %v691 = vadd.f32 %v672, %v683
        %v692 = vadd.f32 %v673, %v685
        %v693 = vadd.f32 %v674, %v687
        %v694 = vstv %s597
        %v695 = vmul.f32 %v611, %v694
        %v696 = vmul.f32 %v612, %v694
        %v697 = vmul.f32 %v613, %v694
        %701 = vrot.lane.b32.xlu0 %v695, 123
        %v702 = vpop.permute.xlu0 %701
        %703 = vrot.lane.b32.xlu0 %v696, 123
        %v704 = vpop.permute.xlu0 %703
        %705 = vrot.lane.b32.xlu0 %v697, 123
        %v706 = vpop.permute.xlu0 %705
        %v710 = vadd.f32 %v691, %v702
        %v711 = vadd.f32 %v692, %v704
        %v712 = vadd.f32 %v693, %v706
        %v713 = vstv %s598
        %v714 = vmul.f32 %v611, %v713
        %v715 = vmul.f32 %v612, %v713
        %v716 = vmul.f32 %v613, %v713
        %720 = vrot.lane.b32.xlu0 %v714, 122
        %v721 = vpop.permute.xlu0 %720
        %722 = vrot.lane.b32.xlu0 %v715, 122
        %v723 = vpop.permute.xlu0 %722
        %724 = vrot.lane.b32.xlu0 %v716, 122
        %v725 = vpop.permute.xlu0 %724
        %v729 = vadd.f32 %v710, %v721
        %v730 = vadd.f32 %v711, %v723
        %v731 = vadd.f32 %v712, %v725
        %v732 = vstv %s599
        %v733 = vmul.f32 %v611, %v732
        %v734 = vmul.f32 %v612, %v732
        %v735 = vmul.f32 %v613, %v732
        %739 = vrot.lane.b32.xlu0 %v733, 121
        %v740 = vpop.permute.xlu0 %739
        %741 = vrot.lane.b32.xlu0 %v734, 121
        %v742 = vpop.permute.xlu0 %741
        %743 = vrot.lane.b32.xlu0 %v735, 121
        %v744 = vpop.permute.xlu0 %743
        %v748 = vadd.f32 %v729, %v740
        %v749 = vadd.f32 %v730, %v742
        %v750 = vadd.f32 %v731, %v744
        %v751 = vstv %s600
        %v752 = vmul.f32 %v611, %v751
        %v753 = vmul.f32 %v612, %v751
        %v754 = vmul.f32 %v613, %v751
        %758 = vrot.lane.b32.xlu0 %v752, 120
        %v759 = vpop.permute.xlu0 %758
        %760 = vrot.lane.b32.xlu0 %v753, 120
        %v761 = vpop.permute.xlu0 %760
        %762 = vrot.lane.b32.xlu0 %v754, 120
        %v763 = vpop.permute.xlu0 %762
        %v767 = vadd.f32 %v748, %v759
        %v768 = vadd.f32 %v749, %v761
        %v769 = vadd.f32 %v750, %v763
        %v770 = vstv %s601
        %v771 = vmul.f32 %v767, %v770
        %v772 = vmul.f32 %v768, %v770
        %v773 = vadd.f32 %v590, %v771
        %v774 = vadd.f32 %v591, %v772
        %v775 = vstv %s602
        %v776 = vmul.f32 %v767, %v775
        %v777 = vmul.f32 %v768, %v775
        %v780 = vrot.slane %v776, 1
        %v781 = vrot.slane %v777, 1
        %v782 = vsel %vm489, %v780, %v781
        %v785 = vadd.f32 %v773, %v782
        %v786 = vadd.f32 %v774, %v781
        %v787 = vstv %s603
        %v788 = vmul.f32 %v767, %v787
        %v789 = vmul.f32 %v768, %v787
        %v792 = vrot.slane %v788, 2
        %v793 = vrot.slane %v789, 2
        %v794 = vsel %vm502, %v792, %v793
        %v797 = vadd.f32 %v785, %v794
        %v798 = vadd.f32 %v786, %v793
        %v799 = vstv %s604
        %v800 = vmul.f32 %v767, %v799
        %v801 = vmul.f32 %v768, %v799
        %v804 = vrot.slane %v800, 3
        %v805 = vrot.slane %v801, 3
        %v806 = vsel %vm515, %v804, %v805
        %v809 = vadd.f32 %v797, %v806
        %v810 = vadd.f32 %v798, %v805
        %v811 = vstv %s605
        %v812 = vmul.f32 %v767, %v811
        %v813 = vmul.f32 %v768, %v811
        %v816 = vrot.slane %v812, 4
        %v817 = vrot.slane %v813, 4
        %v818 = vsel %vm528, %v816, %v817
        %v821 = vadd.f32 %v809, %v818
        %v822 = vadd.f32 %v810, %v817
        %v823 = vstv %s606
        %v824 = vmul.f32 %v767, %v823
        %v825 = vmul.f32 %v768, %v823
        %v826 = vmul.f32 %v769, %v823
        %v830 = vrot.slane %v824, 5
        %v831 = vrot.slane %v825, 5
        %v832 = vsel %vm543, %v830, %v831
        %v833 = vrot.slane %v826, 5
        %v834 = vsel %vm543, %v831, %v833
        %v837 = vadd.f32 %v821, %v832
        %v838 = vadd.f32 %v822, %v834
        %v839 = vstv %s607
        %v840 = vmul.f32 %v767, %v839
        %v841 = vmul.f32 %v768, %v839
        %v842 = vmul.f32 %v769, %v839
        %v846 = vrot.slane %v840, 6
        %v847 = vrot.slane %v841, 6
        %v848 = vsel %vm560, %v846, %v847
        %v849 = vrot.slane %v842, 6
        %v850 = vsel %vm560, %v847, %v849
        %v853 = vadd.f32 %v837, %v848
        %v854 = vadd.f32 %v838, %v850
        %v855 = vstv %s608
        %v856 = vmul.f32 %v767, %v855
        %v857 = vmul.f32 %v768, %v855
        %v858 = vmul.f32 %v769, %v855
        %v862 = vrot.slane %v856, 7
        %v863 = vrot.slane %v857, 7
        %v864 = vsel %vm577, %v862, %v863
        %v865 = vrot.slane %v858, 7
        %v866 = vsel %vm577, %v863, %v865
        %v869 = vadd.f32 %v853, %v864
        %v870 = vadd.f32 %v854, %v866
        %v871 = vstv %s609
        %v872 = vmul.f32 %v768, %v871
        %v873 = vmul.f32 %v769, %v871
        %v874 = vadd.f32 %v869, %v872
        %v875 = vadd.f32 %v870, %v873
        %s876 = sld [smem:[#allocation3 + $0x12]]
        %s877 = sld [smem:[#allocation3 + $0x13]]
        %s878 = sld [smem:[#allocation3 + $0x14]]
        %s879 = sld [smem:[#allocation3 + $0x15]]
        %s880 = sld [smem:[#allocation3 + $0x16]]
        %s881 = sld [smem:[#allocation3 + $0x17]]
        %s882 = sld [smem:[#allocation3 + $0x18]]
        %s883 = sld [smem:[#allocation3 + $0x19]]
        %s884 = sld [smem:[#allocation3 + $0x1a]]
        %s885 = sld [smem:[#allocation7 + $0x12]]
        %s886 = sld [smem:[#allocation7 + $0x13]]
        %s887 = sld [smem:[#allocation7 + $0x14]]
        %s888 = sld [smem:[#allocation7 + $0x15]]
        %s889 = sld [smem:[#allocation7 + $0x16]]
        %s890 = sld [smem:[#allocation7 + $0x17]]
        %s891 = sld [smem:[#allocation7 + $0x18]]
        %s892 = sld [smem:[#allocation7 + $0x19]]
        %s893 = sld [smem:[#allocation7 + $0x1a]]
        %s894 = scalar_lea.vmem [#allocation2], 48
        %v895 = vld [vmem:[%s894] sm:$0xff]
        %v896 = vld [vmem:[%s894 + $0x8] sm:$0xff]
        %v897 = vld [vmem:[%s894 + $0x10] sm:$0xf]
        %v898 = vstv %s876
        %v899 = vmul.f32 %v895, %v898
        %v900 = vmul.f32 %v896, %v898
        %v901 = vmul.f32 %v897, %v898
        %v902 = vstv %s877
        %v903 = vmul.f32 %v895, %v902
        %v904 = vmul.f32 %v896, %v902
        %v905 = vmul.f32 %v897, %v902
        %909 = vrot.lane.b32.xlu0 %v903, 127
        %v910 = vpop.permute.xlu0 %909
        %911 = vrot.lane.b32.xlu0 %v904, 127
        %v912 = vpop.permute.xlu0 %911
        %913 = vrot.lane.b32.xlu0 %v905, 127
        %v914 = vpop.permute.xlu0 %913
        %v918 = vadd.f32 %v899, %v910
        %v919 = vadd.f32 %v900, %v912
        %v920 = vadd.f32 %v901, %v914
        %v921 = vstv %s878
        %v922 = vmul.f32 %v895, %v921
        %v923 = vmul.f32 %v896, %v921
        %v924 = vmul.f32 %v897, %v921
        %928 = vrot.lane.b32.xlu0 %v922, 126
        %v929 = vpop.permute.xlu0 %928
        %930 = vrot.lane.b32.xlu0 %v923, 126
        %v931 = vpop.permute.xlu0 %930
        %932 = vrot.lane.b32.xlu0 %v924, 126
        %v933 = vpop.permute.xlu0 %932
        %v937 = vadd.f32 %v918, %v929
        %v938 = vadd.f32 %v919, %v931
        %v939 = vadd.f32 %v920, %v933
        %v940 = vstv %s879
        %v941 = vmul.f32 %v895, %v940
        %v942 = vmul.f32 %v896, %v940
        %v943 = vmul.f32 %v897, %v940
        %947 = vrot.lane.b32.xlu0 %v941, 125
        %v948 = vpop.permute.xlu0 %947
        %949 = vrot.lane.b32.xlu0 %v942, 125
        %v950 = vpop.permute.xlu0 %949
        %951 = vrot.lane.b32.xlu0 %v943, 125
        %v952 = vpop.permute.xlu0 %951
        %v956 = vadd.f32 %v937, %v948
        %v957 = vadd.f32 %v938, %v950
        %v958 = vadd.f32 %v939, %v952
        %v959 = vstv %s880
        %v960 = vmul.f32 %v895, %v959
        %v961 = vmul.f32 %v896, %v959
        %v962 = vmul.f32 %v897, %v959
        %966 = vrot.lane.b32.xlu0 %v960, 124
        %v967 = vpop.permute.xlu0 %966
        %968 = vrot.lane.b32.xlu0 %v961, 124
        %v969 = vpop.permute.xlu0 %968
        %970 = vrot.lane.b32.xlu0 %v962, 124
        %v971 = vpop.permute.xlu0 %970
        %v975 = vadd.f32 %v956, %v967
        %v976 = vadd.f32 %v957, %v969
        %v977 = vadd.f32 %v958, %v971
        %v978 = vstv %s881
        %v979 = vmul.f32 %v895, %v978
        %v980 = vmul.f32 %v896, %v978
        %v981 = vmul.f32 %v897, %v978
        %985 = vrot.lane.b32.xlu0 %v979, 123
        %v986 = vpop.permute.xlu0 %985
        %987 = vrot.lane.b32.xlu0 %v980, 123
        %v988 = vpop.permute.xlu0 %987
        %989 = vrot.lane.b32.xlu0 %v981, 123
        %v990 = vpop.permute.xlu0 %989
        %v994 = vadd.f32 %v975, %v986
        %v995 = vadd.f32 %v976, %v988
        %v996 = vadd.f32 %v977, %v990
        %v997 = vstv %s882
        %v998 = vmul.f32 %v895, %v997
        %v999 = vmul.f32 %v896, %v997
        %v1000 = vmul.f32 %v897, %v997
        %1004 = vrot.lane.b32.xlu0 %v998, 122
        %v1005 = vpop.permute.xlu0 %1004
        %1006 = vrot.lane.b32.xlu0 %v999, 122
        %v1007 = vpop.permute.xlu0 %1006
        %1008 = vrot.lane.b32.xlu0 %v1000, 122
        %v1009 = vpop.permute.xlu0 %1008
        %v1013 = vadd.f32 %v994, %v1005
        %v1014 = vadd.f32 %v995, %v1007
        %v1015 = vadd.f32 %v996, %v1009
        %v1016 = vstv %s883
        %v1017 = vmul.f32 %v895, %v1016
        %v1018 = vmul.f32 %v896, %v1016
        %v1019 = vmul.f32 %v897, %v1016
        %1023 = vrot.lane.b32.xlu0 %v1017, 121
        %v1024 = vpop.permute.xlu0 %1023
        %1025 = vrot.lane.b32.xlu0 %v1018, 121
        %v1026 = vpop.permute.xlu0 %1025
        %1027 = vrot.lane.b32.xlu0 %v1019, 121
        %v1028 = vpop.permute.xlu0 %1027
        %v1032 = vadd.f32 %v1013, %v1024
        %v1033 = vadd.f32 %v1014, %v1026
        %v1034 = vadd.f32 %v1015, %v1028
        %v1035 = vstv %s884
        %v1036 = vmul.f32 %v895, %v1035
        %v1037 = vmul.f32 %v896, %v1035
        %v1038 = vmul.f32 %v897, %v1035
        %1042 = vrot.lane.b32.xlu0 %v1036, 120
        %v1043 = vpop.permute.xlu0 %1042
        %1044 = vrot.lane.b32.xlu0 %v1037, 120
        %v1045 = vpop.permute.xlu0 %1044
        %1046 = vrot.lane.b32.xlu0 %v1038, 120
        %v1047 = vpop.permute.xlu0 %1046
        %v1051 = vadd.f32 %v1032, %v1043
        %v1052 = vadd.f32 %v1033, %v1045
        %v1053 = vadd.f32 %v1034, %v1047
        %v1054 = vstv %s885
        %v1055 = vmul.f32 %v1051, %v1054
        %v1056 = vmul.f32 %v1052, %v1054
        %v1057 = vadd.f32 %v874, %v1055
        %v1058 = vadd.f32 %v875, %v1056
        %v1059 = vstv %s886
        %v1060 = vmul.f32 %v1051, %v1059
        %v1061 = vmul.f32 %v1052, %v1059
        %v1064 = vrot.slane %v1060, 1
        %v1065 = vrot.slane %v1061, 1
        %v1066 = vsel %vm489, %v1064, %v1065
        %v1069 = vadd.f32 %v1057, %v1066
        %v1070 = vadd.f32 %v1058, %v1065
        %v1071 = vstv %s887
        %v1072 = vmul.f32 %v1051, %v1071
        %v1073 = vmul.f32 %v1052, %v1071
        %v1076 = vrot.slane %v1072, 2
        %v1077 = vrot.slane %v1073, 2
        %v1078 = vsel %vm502, %v1076, %v1077
        %v1081 = vadd.f32 %v1069, %v1078
        %v1082 = vadd.f32 %v1070, %v1077
        %v1083 = vstv %s888
        %v1084 = vmul.f32 %v1051, %v1083
        %v1085 = vmul.f32 %v1052, %v1083
        %v1088 = vrot.slane %v1084, 3
        %v1089 = vrot.slane %v1085, 3
        %v1090 = vsel %vm515, %v1088, %v1089
        %v1093 = vadd.f32 %v1081, %v1090
        %v1094 = vadd.f32 %v1082, %v1089
        %v1095 = vstv %s889
        %v1096 = vmul.f32 %v1051, %v1095
        %v1097 = vmul.f32 %v1052, %v1095
        %v1100 = vrot.slane %v1096, 4
        %v1101 = vrot.slane %v1097, 4
        %v1102 = vsel %vm528, %v1100, %v1101
        %v1105 = vadd.f32 %v1093, %v1102
        %v1106 = vadd.f32 %v1094, %v1101
        %v1107 = vstv %s890
        %v1108 = vmul.f32 %v1051, %v1107
        %v1109 = vmul.f32 %v1052, %v1107
        %v1110 = vmul.f32 %v1053, %v1107
        %v1114 = vrot.slane %v1108, 5
        %v1115 = vrot.slane %v1109, 5
        %v1116 = vsel %vm543, %v1114, %v1115
        %v1117 = vrot.slane %v1110, 5
        %v1118 = vsel %vm543, %v1115, %v1117
        %v1121 = vadd.f32 %v1105, %v1116
        %v1122 = vadd.f32 %v1106, %v1118
        %v1123 = vstv %s891
        %v1124 = vmul.f32 %v1051, %v1123
        %v1125 = vmul.f32 %v1052, %v1123
        %v1126 = vmul.f32 %v1053, %v1123
        %v1130 = vrot.slane %v1124, 6
        %v1131 = vrot.slane %v1125, 6
        %v1132 = vsel %vm560, %v1130, %v1131
        %v1133 = vrot.slane %v1126, 6
        %v1134 = vsel %vm560, %v1131, %v1133
        %v1137 = vadd.f32 %v1121, %v1132
        %v1138 = vadd.f32 %v1122, %v1134
        %v1139 = vstv %s892
        %v1140 = vmul.f32 %v1051, %v1139
        %v1141 = vmul.f32 %v1052, %v1139
        %v1142 = vmul.f32 %v1053, %v1139
        %v1146 = vrot.slane %v1140, 7
        %v1147 = vrot.slane %v1141, 7
        %v1148 = vsel %vm577, %v1146, %v1147
        %v1149 = vrot.slane %v1142, 7
        %v1150 = vsel %vm577, %v1147, %v1149
        %v1153 = vadd.f32 %v1137, %v1148
        %v1154 = vadd.f32 %v1138, %v1150
        %v1155 = vstv %s893
        %v1156 = vmul.f32 %v1052, %v1155
        %v1157 = vmul.f32 %v1053, %v1155
        %v1158 = vadd.f32 %v1153, %v1156
        %v1159 = vadd.f32 %v1154, %v1157
        %s1160 = sld [smem:[#allocation3 + $0x1b]]
        %s1161 = sld [smem:[#allocation3 + $0x1c]]
        %s1162 = sld [smem:[#allocation3 + $0x1d]]
        %s1163 = sld [smem:[#allocation3 + $0x1e]]
        %s1164 = sld [smem:[#allocation3 + $0x1f]]
        %s1165 = sld [smem:[#allocation3 + $0x20]]
        %s1166 = sld [smem:[#allocation3 + $0x21]]
        %s1167 = sld [smem:[#allocation3 + $0x22]]
        %s1168 = sld [smem:[#allocation3 + $0x23]]
        %s1169 = sld [smem:[#allocation7 + $0x1b]]
        %s1170 = sld [smem:[#allocation7 + $0x1c]]
        %s1171 = sld [smem:[#allocation7 + $0x1d]]
        %s1172 = sld [smem:[#allocation7 + $0x1e]]
        %s1173 = sld [smem:[#allocation7 + $0x1f]]
        %s1174 = sld [smem:[#allocation7 + $0x20]]
        %s1175 = sld [smem:[#allocation7 + $0x21]]
        %s1176 = sld [smem:[#allocation7 + $0x22]]
        %s1177 = sld [smem:[#allocation7 + $0x23]]
        %s1178 = scalar_lea.vmem [#allocation2], 72
        %v1179 = vld [vmem:[%s1178] sm:$0xff]
        %v1180 = vld [vmem:[%s1178 + $0x8] sm:$0xff]
        %v1181 = vld [vmem:[%s1178 + $0x10] sm:$0xf]
        %v1182 = vstv %s1160
        %v1183 = vmul.f32 %v1179, %v1182
        %v1184 = vmul.f32 %v1180, %v1182
        %v1185 = vmul.f32 %v1181, %v1182
        %v1186 = vstv %s1161
        %v1187 = vmul.f32 %v1179, %v1186
        %v1188 = vmul.f32 %v1180, %v1186
        %v1189 = vmul.f32 %v1181, %v1186
        %1193 = vrot.lane.b32.xlu0 %v1187, 127
        %v1194 = vpop.permute.xlu0 %1193
        %1195 = vrot.lane.b32.xlu0 %v1188, 127
        %v1196 = vpop.permute.xlu0 %1195
        %1197 = vrot.lane.b32.xlu0 %v1189, 127
        %v1198 = vpop.permute.xlu0 %1197
        %v1202 = vadd.f32 %v1183, %v1194
        %v1203 = vadd.f32 %v1184, %v1196
        %v1204 = vadd.f32 %v1185, %v1198
        %v1205 = vstv %s1162
        %v1206 = vmul.f32 %v1179, %v1205
        %v1207 = vmul.f32 %v1180, %v1205
        %v1208 = vmul.f32 %v1181, %v1205
        %1212 = vrot.lane.b32.xlu0 %v1206, 126
        %v1213 = vpop.permute.xlu0 %1212
        %1214 = vrot.lane.b32.xlu0 %v1207, 126
        %v1215 = vpop.permute.xlu0 %1214
        %1216 = vrot.lane.b32.xlu0 %v1208, 126
        %v1217 = vpop.permute.xlu0 %1216
        %v1221 = vadd.f32 %v1202, %v1213
        %v1222 = vadd.f32 %v1203, %v1215
        %v1223 = vadd.f32 %v1204, %v1217
        %v1224 = vstv %s1163
        %v1225 = vmul.f32 %v1179, %v1224
        %v1226 = vmul.f32 %v1180, %v1224
        %v1227 = vmul.f32 %v1181, %v1224
        %1231 = vrot.lane.b32.xlu0 %v1225, 125
        %v1232 = vpop.permute.xlu0 %1231
        %1233 = vrot.lane.b32.xlu0 %v1226, 125
        %v1234 = vpop.permute.xlu0 %1233
        %1235 = vrot.lane.b32.xlu0 %v1227, 125
        %v1236 = vpop.permute.xlu0 %1235
        %v1240 = vadd.f32 %v1221, %v1232
        %v1241 = vadd.f32 %v1222, %v1234
        %v1242 = vadd.f32 %v1223, %v1236
        %v1243 = vstv %s1164
        %v1244 = vmul.f32 %v1179, %v1243
        %v1245 = vmul.f32 %v1180, %v1243
        %v1246 = vmul.f32 %v1181, %v1243
        %1250 = vrot.lane.b32.xlu0 %v1244, 124
        %v1251 = vpop.permute.xlu0 %1250
        %1252 = vrot.lane.b32.xlu0 %v1245, 124
        %v1253 = vpop.permute.xlu0 %1252
        %1254 = vrot.lane.b32.xlu0 %v1246, 124
        %v1255 = vpop.permute.xlu0 %1254
        %v1259 = vadd.f32 %v1240, %v1251
        %v1260 = vadd.f32 %v1241, %v1253
        %v1261 = vadd.f32 %v1242, %v1255
        %v1262 = vstv %s1165
        %v1263 = vmul.f32 %v1179, %v1262
        %v1264 = vmul.f32 %v1180, %v1262
        %v1265 = vmul.f32 %v1181, %v1262
        %1269 = vrot.lane.b32.xlu0 %v1263, 123
        %v1270 = vpop.permute.xlu0 %1269
        %1271 = vrot.lane.b32.xlu0 %v1264, 123
        %v1272 = vpop.permute.xlu0 %1271
        %1273 = vrot.lane.b32.xlu0 %v1265, 123
        %v1274 = vpop.permute.xlu0 %1273
        %v1278 = vadd.f32 %v1259, %v1270
        %v1279 = vadd.f32 %v1260, %v1272
        %v1280 = vadd.f32 %v1261, %v1274
        %v1281 = vstv %s1166
        %v1282 = vmul.f32 %v1179, %v1281
        %v1283 = vmul.f32 %v1180, %v1281
        %v1284 = vmul.f32 %v1181, %v1281
        %1288 = vrot.lane.b32.xlu0 %v1282, 122
        %v1289 = vpop.permute.xlu0 %1288
        %1290 = vrot.lane.b32.xlu0 %v1283, 122
        %v1291 = vpop.permute.xlu0 %1290
        %1292 = vrot.lane.b32.xlu0 %v1284, 122
        %v1293 = vpop.permute.xlu0 %1292
        %v1297 = vadd.f32 %v1278, %v1289
        %v1298 = vadd.f32 %v1279, %v1291
        %v1299 = vadd.f32 %v1280, %v1293
        %v1300 = vstv %s1167
        %v1301 = vmul.f32 %v1179, %v1300
        %v1302 = vmul.f32 %v1180, %v1300
        %v1303 = vmul.f32 %v1181, %v1300
        %1307 = vrot.lane.b32.xlu0 %v1301, 121
        %v1308 = vpop.permute.xlu0 %1307
        %1309 = vrot.lane.b32.xlu0 %v1302, 121
        %v1310 = vpop.permute.xlu0 %1309
        %1311 = vrot.lane.b32.xlu0 %v1303, 121
        %v1312 = vpop.permute.xlu0 %1311
        %v1316 = vadd.f32 %v1297, %v1308
        %v1317 = vadd.f32 %v1298, %v1310
        %v1318 = vadd.f32 %v1299, %v1312
        %v1319 = vstv %s1168
        %v1320 = vmul.f32 %v1179, %v1319
        %v1321 = vmul.f32 %v1180, %v1319
        %v1322 = vmul.f32 %v1181, %v1319
        %1326 = vrot.lane.b32.xlu0 %v1320, 120
        %v1327 = vpop.permute.xlu0 %1326
        %1328 = vrot.lane.b32.xlu0 %v1321, 120
        %v1329 = vpop.permute.xlu0 %1328
        %1330 = vrot.lane.b32.xlu0 %v1322, 120
        %v1331 = vpop.permute.xlu0 %1330
        %v1335 = vadd.f32 %v1316, %v1327
        %v1336 = vadd.f32 %v1317, %v1329
        %v1337 = vadd.f32 %v1318, %v1331
        %v1338 = vstv %s1169
        %v1339 = vmul.f32 %v1335, %v1338
        %v1340 = vmul.f32 %v1336, %v1338
        %v1341 = vadd.f32 %v1158, %v1339
        %v1342 = vadd.f32 %v1159, %v1340
        %v1343 = vstv %s1170
        %v1344 = vmul.f32 %v1335, %v1343
        %v1345 = vmul.f32 %v1336, %v1343
        %v1348 = vrot.slane %v1344, 1
        %v1349 = vrot.slane %v1345, 1
        %v1350 = vsel %vm489, %v1348, %v1349
        %v1353 = vadd.f32 %v1341, %v1350
        %v1354 = vadd.f32 %v1342, %v1349
        %v1355 = vstv %s1171
        %v1356 = vmul.f32 %v1335, %v1355
        %v1357 = vmul.f32 %v1336, %v1355
        %v1360 = vrot.slane %v1356, 2
        %v1361 = vrot.slane %v1357, 2
        %v1362 = vsel %vm502, %v1360, %v1361
        %v1365 = vadd.f32 %v1353, %v1362
        %v1366 = vadd.f32 %v1354, %v1361
        %v1367 = vstv %s1172
        %v1368 = vmul.f32 %v1335, %v1367
        %v1369 = vmul.f32 %v1336, %v1367
        %v1372 = vrot.slane %v1368, 3
        %v1373 = vrot.slane %v1369, 3
        %v1374 = vsel %vm515, %v1372, %v1373
        %v1377 = vadd.f32 %v1365, %v1374
        %v1378 = vadd.f32 %v1366, %v1373
        %v1379 = vstv %s1173
        %v1380 = vmul.f32 %v1335, %v1379
        %v1381 = vmul.f32 %v1336, %v1379
        %v1384 = vrot.slane %v1380, 4
        %v1385 = vrot.slane %v1381, 4
        %v1386 = vsel %vm528, %v1384, %v1385
        %v1389 = vadd.f32 %v1377, %v1386
        %v1390 = vadd.f32 %v1378, %v1385
        %v1391 = vstv %s1174
        %v1392 = vmul.f32 %v1335, %v1391
        %v1393 = vmul.f32 %v1336, %v1391
        %v1394 = vmul.f32 %v1337, %v1391
        %v1398 = vrot.slane %v1392, 5
        %v1399 = vrot.slane %v1393, 5
        %v1400 = vsel %vm543, %v1398, %v1399
        %v1401 = vrot.slane %v1394, 5
        %v1402 = vsel %vm543, %v1399, %v1401
        %v1405 = vadd.f32 %v1389, %v1400
        %v1406 = vadd.f32 %v1390, %v1402
        %v1407 = vstv %s1175
        %v1408 = vmul.f32 %v1335, %v1407
        %v1409 = vmul.f32 %v1336, %v1407
        %v1410 = vmul.f32 %v1337, %v1407
        %v1414 = vrot.slane %v1408, 6
        %v1415 = vrot.slane %v1409, 6
        %v1416 = vsel %vm560, %v1414, %v1415
        %v1417 = vrot.slane %v1410, 6
        %v1418 = vsel %vm560, %v1415, %v1417
        %v1421 = vadd.f32 %v1405, %v1416
        %v1422 = vadd.f32 %v1406, %v1418
        %v1423 = vstv %s1176
        %v1424 = vmul.f32 %v1335, %v1423
        %v1425 = vmul.f32 %v1336, %v1423
        %v1426 = vmul.f32 %v1337, %v1423
        %v1430 = vrot.slane %v1424, 7
        %v1431 = vrot.slane %v1425, 7
        %v1432 = vsel %vm577, %v1430, %v1431
        %v1433 = vrot.slane %v1426, 7
        %v1434 = vsel %vm577, %v1431, %v1433
        %v1437 = vadd.f32 %v1421, %v1432
        %v1438 = vadd.f32 %v1422, %v1434
        %v1439 = vstv %s1177
        %v1440 = vmul.f32 %v1336, %v1439
        %v1441 = vmul.f32 %v1337, %v1439
        %v1442 = vadd.f32 %v1437, %v1440
        %v1443 = vadd.f32 %v1438, %v1441
        %vm1444 = vcmask 97280
        %1445 = vst.msk [vmem:[%s215] sm:$0xff] %vm1444, %v1442
        %vm1446 = vcmask 93184
        %1447 = vst.msk [vmem:[%s215 + $0x8] sm:$0xf] %vm1446, %v1443
        %p1448 = scmp.lt.s32.totalorder %s19, 1
        %s1449 = scalar_select %p1448, %s19, 1
        %s1450 = smul.addr %s1449, 2
        %s1451 = smul.addr %s1450, 8
        %s1452 = scalar_lea.vmem %s3, %s1451
        // Predicated region
        $region45: #{tpu_custom_call.1} parent=31 // pred_check
          %p1453 = pneg %p105
        $region46: #{tpu_custom_call.1} parent=31 // pred_check_branch
          %1455 = sbr.rel (%p1453) target = $region48
        $region47: #{tpu_custom_call.1} parent=31 // pred_region
          _
        $region48: #{tpu_custom_call.1} parent=31 // pred_fallthru
          _
      $region32: #{tpu_custom_call.1} parent=5 // pred_fallthru
        _
      %p1456 = scmp.le.s32.totalorder 2, %s14
      // Predicated region
      $region49: #{tpu_custom_call.1} parent=5 // pred_check
        %p1457 = pneg %p1456
      $region50: #{tpu_custom_call.1} parent=5 // pred_check_branch
        %1459 = sbr.rel (%p1457) target = $region52
      $region51: #{tpu_custom_call.1} parent=5 // pred_region
        %s1460 = ssub.s32 %s14, 2
        // Predicated region
        $region53: #{tpu_custom_call.1} parent=51 // pred_check
          %p1461 = pneg %p111
        $region54: #{tpu_custom_call.1} parent=51 // pred_check_branch
          %1463 = sbr.rel (%p1461) target = $region56
        $region55: #{tpu_custom_call.1} parent=51 // pred_region
          %p1464 = scmp.lt.s32.totalorder %s20, 1
          %s1465 = scalar_select %p1464, %s20, 1
          %s1466 = smul.addr %s1465, 2
          %s1467 = smul.addr %s1466, 8
          %s1468 = scalar_lea.vmem %s3, %s1467
        $region56: #{tpu_custom_call.1} parent=51 // pred_fallthru
          _
      $region52: #{tpu_custom_call.1} parent=5 // pred_fallthru
        _
    $region6: #{tpu_custom_call.1} parent=1 // loop_footer
      %s18 = sadd.s32 1, %s14
    $region7: #{tpu_custom_call.1} parent=1 // loop_footer_branch
      %13 = sbr.rel target = $region3
    $region8: #{tpu_custom_call.1} parent=1 // loop_exit
      _
    %1469 = vsyncpa [#allocation4], 1
    %s1470 = scalar_lea.sflag [#allocation4], 1
    %1471 = vsyncpa %s1470, 1
    %1472 = vsyncpa [#allocation5], 1
    %s1473 = scalar_lea.sflag [#allocation5], 1
    %1474 = vsyncpa %s1473, 1
    %1475 = vsyncpa [#allocation6], 1
    %s1476 = scalar_lea.sflag [#allocation6], 1
    %1477 = vsyncpa %s1476, 1

</llo_original>
